<compile_context>
chip_gen: v7x
topology: tpu7x:2x2x1
jax: 0.10.0
libtpu: 0.0.40
codegen_flags: <defaults>
</compile_context>

<pallas_src>
import math
from functools import partial

import jax
import jax.numpy as jnp
from jax import lax
from jax.experimental import pallas as pl
from jax.experimental.pallas import tpu as pltpu


def _round_up(x, m):
    return ((x + m - 1) // m) * m


def _default_gate_dtype():
    # bf16 VPU/EUP exist on v6e/v7x; v5e and older need f32 gate math.
    try:
        kind = jax.devices()[0].device_kind.lower()
    except Exception:
        return jnp.float32
    return jnp.bfloat16 if ("v6" in kind or "v7" in kind) else jnp.float32


def _pick_tile_m(M, T, N, C, F):
    # vreg-pressure cap for the (possibly unrolled) GRU step: the f32 carry h
    # plus u/r/o/hh temps must coexist; at F=256 keep tm <= 64 (review).
    if F <= 64:
        cap = 256
    elif F <= 128:
        cap = 128
    else:
        cap = 64
    tm = min(cap, _round_up(M, 8))

    # Per-tile VMEM footprint: double-buffered bf16 x tile + f32 out tile,
    # plus the bf16 gate-major gx scratch. Keep well under the smallest scoped
    # VMEM default across generations (v5e: 16 MiB).
    def bytes_for(t):
        x_tile = T * N * t * C * 2          # bf16
        out_tile = t * F * 4                # f32
        gx = N * 3 * t * F * 2              # bf16 scratch
        return 2 * (x_tile + out_tile) + gx

    while tm > 8 and bytes_for(tm) > (12 << 20):
        tm = max(8, _round_up(tm // 2, 8))
    return tm


# -----------------------------------------------------------------------------
# Fused kernel (one grid step handles a tile of tm = batch*pixel rows):
#   x_ref    : (T*N, tm, C)   rows axis0 ordered (t, n); channels last (bf16)
#   wproj_ref: (C, F)         backbone-proxy 1x1x1 projection (bf16)
#   bproj_ref: (1, F)         f32
#   wx3_ref  : (F, 3F)        packed x-side gate weights [update|reset|out] (bf16)
#   wh2_ref  : (F, 2F)        packed h-side gate weights [update|reset]     (bf16)
#   woh_ref  : (F, F)         h-side out-gate weight                        (bf16)
#   b3_ref   : (1, 3F)        packed gate biases [bu|br|bo], f32
#   o_ref    : (tm, F)        final hidden state tile == context[:, -1] (f32)
#   gx_ref   : (N, 3, tm, F)  VMEM scratch, bf16, gate-major & tile-aligned
# -----------------------------------------------------------------------------
def _dpc_fused_kernel(x_ref, wproj_ref, bproj_ref, wx3_ref, wh2_ref, woh_ref,
                      b3_ref, o_ref, gx_ref, *, T, N, F, gate_dtype, unroll):
    tm = o_ref.shape[0]
    mm_dt = wproj_ref.dtype
    f32 = jnp.float32
    inv_T = 1.0 / T

    wproj = wproj_ref[...]
    bproj = bproj_ref[...]
    wx3 = wx3_ref[...]
    b3 = b3_ref[...]

    # ---- feature head + x-side gate projections (hoisted off the recurrence).
    # Per (t, n): 1x1x1 projection + ReLU, accumulated over t  ==  F.relu then
    # F.avg_pool3d((T,1,1)).  Only (tm, F)-sized intermediates are live.
    for n in range(N):                                    # static & tiny
        acc = None
        for t in range(T):                                # static & tiny
            y = jnp.dot(x_ref[t * N + n], wproj, preferred_element_type=f32)
            y = jnp.maximum(y + bproj, 0.0)               # F.relu
            acc = y if acc is None else acc + y
        feat_n = acc * inv_T                              # (tm, F), temporal mean
        gxn = jnp.dot(feat_n.astype(mm_dt), wx3,
                      preferred_element_type=f32) + b3    # (tm, 3F) [u|r|o]
        # gate-major, tile-aligned bf16 scratch (halves the biggest VMEM user)
        gx_ref[n, 0] = gxn[:, 0:F].astype(gx_ref.dtype)
        gx_ref[n, 1] = gxn[:, F:2 * F].astype(gx_ref.dtype)
        gx_ref[n, 2] = gxn[:, 2 * F:3 * F].astype(gx_ref.dtype)

    wh2 = wh2_ref[...]
    woh = woh_ref[...]

    # ---- sequential ConvGRU (kernel_size=1): only h-dependent matmuls remain
    # on the serial chain; hidden state is a vreg-resident f32 loop carry.
    def step(n, h):
        g = gx_ref[n]                                     # (3, tm, F) aligned load
        hh = jnp.dot(h.astype(mm_dt), wh2,
                     preferred_element_type=f32)          # (tm, 2F) [u|r]
        u = jax.nn.sigmoid((g[0].astype(f32) + hh[:, 0:F]).astype(gate_dtype))
        r = jax.nn.sigmoid((g[1].astype(f32) + hh[:, F:2 * F]).astype(gate_dtype))
        rh = r.astype(f32) * h
        o = jnp.tanh((g[2].astype(f32) +
                      jnp.dot(rh.astype(mm_dt), woh,
                              preferred_element_type=f32)).astype(gate_dtype))
        return h + u.astype(f32) * (o.astype(f32) - h)    # == h*(1-u) + o*u

    h = lax.fori_loop(0, N, step, jnp.zeros((tm, F), f32), unroll=unroll)
    o_ref[...] = h                                        # lane-dense single store


def _dpc_fused(x, w_proj, b_proj, wx3, wh2, woh, b3, *, T, N, F, tm, gate_dtype):
    C = x.shape[-1]
    Mp = x.shape[1]
    grid_m = Mp // tm
    unroll = N <= 8        # keep the loop visible for large N (vreg pressure)
    kernel = partial(_dpc_fused_kernel, T=T, N=N, F=F,
                     gate_dtype=gate_dtype, unroll=unroll)
    return pl.pallas_call(
        kernel,
        out_shape=jax.ShapeDtypeStruct((Mp, F), jnp.float32),
        grid_spec=pltpu.PrefetchScalarGridSpec(
            num_scalar_prefetch=0,
            grid=(grid_m,),
            in_specs=[
                pl.BlockSpec((T * N, tm, C), lambda i: (0, i, 0)),   # x, M-tiled
                pl.BlockSpec((C, F), lambda i: (0, 0)),              # wproj
                pl.BlockSpec((1, F), lambda i: (0, 0)),              # bproj
                pl.BlockSpec((F, 3 * F), lambda i: (0, 0)),          # wx3
                pl.BlockSpec((F, 2 * F), lambda i: (0, 0)),          # wh2
                pl.BlockSpec((F, F), lambda i: (0, 0)),              # woh
                pl.BlockSpec((1, 3 * F), lambda i: (0, 0)),          # b3
            ],
            out_specs=pl.BlockSpec((tm, F), lambda i: (i, 0)),
            scratch_shapes=[pltpu.VMEM((N, 3, tm, F), jnp.bfloat16)],
        ),
        compiler_params=pltpu.CompilerParams(
            dimension_semantics=("parallel",),
            vmem_limit_bytes=32 * 1024 * 1024),
    )(x, w_proj, b_proj, wx3, wh2, woh, b3)


# -----------------------------------------------------------------------------
# Parameter init (matches DPC._initialize_weights for the ConvGRU:
# conv weights orthogonal (gain=1), biases zero).
# -----------------------------------------------------------------------------
def orthogonal_rows(key, rows, cols):
    # like nn.init.orthogonal_ on a (rows, cols) matrix with rows <= cols
    a = jax.random.normal(key, (cols, rows), dtype=jnp.float32)
    q, r = jnp.linalg.qr(a)                       # q: (cols, rows)
    d = jnp.sign(jnp.diagonal(r))
    d = jnp.where(d == 0, 1.0, d)
    return (q * d[None, :]).T                     # (rows, cols), orthonormal rows


def init_params(key, in_channels, feature_size):
    F = feature_size
    k_proj, k_r, k_u, k_o = jax.random.split(key, 4)
    w_proj = jax.random.normal(k_proj, (in_channels, F), jnp.float32) / math.sqrt(in_channels)
    b_proj = jnp.zeros((F,), jnp.float32)

    def gate(k):
        W = orthogonal_rows(k, F, 2 * F)          # conv weight (F, 2F) = [x | h]
        return W[:, :F].T, W[:, F:].T, jnp.zeros((F,), jnp.float32)

    wrx, wrh, br = gate(k_r)                      # reset gate
    wux, wuh, bu = gate(k_u)                      # update gate
    wox, woh, bo = gate(k_o)                      # out gate
    return dict(w_proj=w_proj, b_proj=b_proj,
                wrx=wrx, wrh=wrh, br=br,
                wux=wux, wuh=wuh, bu=bu,
                wox=wox, woh=woh, bo=bo)


# -----------------------------------------------------------------------------
# DPC.forward
# -----------------------------------------------------------------------------
@partial(jax.jit, static_argnames=("last_duration", "last_size", "feature_size"))
def dpc_forward(block, params, *, last_duration, last_size, feature_size):
    B, N, C, SL, H, W = block.shape
    T, ls, F = last_duration, last_size, feature_size
    M = B * ls * ls

    # TODO(synk): proxy backbone pooling assumes SL % T == 0 and H % ls == 0
    # (true for the standard sample_size/seq_len configs); the real resnet18
    # backbone is external to this module.
    x = block.reshape(B, N, C, T, SL // T, ls, H // ls, ls, W // ls)
    x = x.mean(axis=(4, 6, 8))                     # (B, N, C, T, ls, ls)
    x = jnp.transpose(x, (3, 1, 0, 4, 5, 2))       # (T, N, B, ls, ls, C) - tiny
    x = x.reshape(T * N, M, C)

    # M-tiling: pad the independent batch*pixel axis to a multiple of the tile.
    tm = _pick_tile_m(M, T, N, C, F)
    Mp = _round_up(M, tm)
    if Mp != M:
        x = jnp.pad(x, ((0, 0), (0, Mp - M), (0, 0)))

    # Pack / cast params: bf16 MXU operands, f32 biases & accumulation.
    mm_dt = jnp.bfloat16
    w_proj = params["w_proj"].astype(mm_dt)
    b_proj = params["b_proj"].reshape(1, F)
    wx3 = jnp.concatenate([params["wux"], params["wrx"], params["wox"]],
                          axis=1).astype(mm_dt)                     # (F, 3F)
    wh2 = jnp.concatenate([params["wuh"], params["wrh"]],
                          axis=1).astype(mm_dt)                     # (F, 2F)
    woh = params["woh"].astype(mm_dt)                               # (F, F)
    b3 = jnp.concatenate([params["bu"], params["br"], params["bo"]]
                         ).reshape(1, 3 * F)

    ctx = _dpc_fused(x.astype(mm_dt), w_proj, b_proj, wx3, wh2, woh, b3,
                     T=T, N=N, F=F, tm=tm,
                     gate_dtype=_default_gate_dtype())   # (Mp, F)

    # back to PyTorch NCHW: (B, feature_size, last_size, last_size)
    ctx = ctx[:M].reshape(B, ls, ls, F)
    return jnp.transpose(ctx, (0, 3, 1, 2))


if __name__ == "__main__":
    # small shapes consistent with DPC(sample_size=64, num_seq=3, seq_len=8)
    B, num_seq, C, seq_len, sample_size = 2, 3, 3, 8, 64
    feature_size = 32                                  # real resnet18 would be 256
    last_duration = int(math.ceil(seq_len / 4))        # 2
    last_size = int(math.ceil(sample_size / 32))       # 2

    key = jax.random.PRNGKey(0)
    k_in, k_p = jax.random.split(key)
    block = jax.random.normal(
        k_in, (B, num_seq, C, seq_len, sample_size, sample_size), jnp.float32)
    params = init_params(k_p, C, feature_size)

    out = dpc_forward(block, params,
                      last_duration=last_duration,
                      last_size=last_size,
                      feature_size=feature_size)
    out = jax.block_until_ready(out)
    assert out.shape == (B, feature_size, last_size, last_size), out.shape
    assert bool(jnp.all(jnp.isfinite(out)))
    print("KERNEL_OK")
</pallas_src>

<mosaic_0001>
module attributes {stable_mosaic.version = 11 : i64} {
  func.func @_dpc_fused_kernel(%arg0: i32, %arg1: memref<6x8x3xbf16, #tpu.memory_space<vmem>>, %arg2: memref<3x32xbf16, #tpu.memory_space<vmem>>, %arg3: memref<1x32xf32, #tpu.memory_space<vmem>>, %arg4: memref<32x96xbf16, #tpu.memory_space<vmem>>, %arg5: memref<32x64xbf16, #tpu.memory_space<vmem>>, %arg6: memref<32x32xbf16, #tpu.memory_space<vmem>>, %arg7: memref<1x96xf32, #tpu.memory_space<vmem>>, %arg8: memref<8x32xf32, #tpu.memory_space<vmem>>, %arg9: memref<3x3x8x32xbf16, #tpu.memory_space<vmem>>) attributes {dimension_semantics = [#tpu.dimension_semantics<parallel>], iteration_bounds = array<i64: 1>, scalar_prefetch = 0 : i64, scratch_operands = 1 : i64, tpu.core_type = #tpu.core_type<tc>, window_params = [{transform_indices = @transform_0, window_bounds = array<i64: 6, 8, 3>}, {pipeline_mode = #tpu.pipeline_mode<synchronous>, transform_indices = @transform_1, window_bounds = array<i64: 3, 32>}, {pipeline_mode = #tpu.pipeline_mode<synchronous>, transform_indices = @transform_2, window_bounds = array<i64: 1, 32>}, {pipeline_mode = #tpu.pipeline_mode<synchronous>, transform_indices = @transform_3, window_bounds = array<i64: 32, 96>}, {pipeline_mode = #tpu.pipeline_mode<synchronous>, transform_indices = @transform_4, window_bounds = array<i64: 32, 64>}, {pipeline_mode = #tpu.pipeline_mode<synchronous>, transform_indices = @transform_5, window_bounds = array<i64: 32, 32>}, {pipeline_mode = #tpu.pipeline_mode<synchronous>, transform_indices = @transform_6, window_bounds = array<i64: 1, 96>}, {transform_indices = @transform_7, window_bounds = array<i64: 8, 32>}]} {
    %c0 = arith.constant 0 : index
    %c0_0 = arith.constant 0 : index
    %0 = vector.load %arg2[%c0, %c0_0] : memref<3x32xbf16, #tpu.memory_space<vmem>>, vector<3x32xbf16>
    %c0_1 = arith.constant 0 : index
    %c0_2 = arith.constant 0 : index
    %1 = vector.load %arg3[%c0_1, %c0_2] : memref<1x32xf32, #tpu.memory_space<vmem>>, vector<1x32xf32>
    %c0_3 = arith.constant 0 : index
    %c0_4 = arith.constant 0 : index
    %2 = vector.load %arg4[%c0_3, %c0_4] : memref<32x96xbf16, #tpu.memory_space<vmem>>, vector<32x96xbf16>
    %c0_5 = arith.constant 0 : index
    %c0_6 = arith.constant 0 : index
    %3 = vector.load %arg7[%c0_5, %c0_6] : memref<1x96xf32, #tpu.memory_space<vmem>>, vector<1x96xf32>
    %c0_7 = arith.constant 0 : index
    %c0_8 = arith.constant 0 : index
    %c0_9 = arith.constant 0 : index
    %4 = vector.load %arg1[%c0_7, %c0_8, %c0_9] : memref<6x8x3xbf16, #tpu.memory_space<vmem>>, vector<1x8x3xbf16>
    %5 = vector.shape_cast %4 : vector<1x8x3xbf16> to vector<8x3xbf16>
    %cst = arith.constant dense<0.000000e+00> : vector<8x32xf32>
    %6 = tpu.matmul %5, %0, %cst {dimension_numbers = #tpu.dot_dimension_numbers<[1], [0], [0], [1], [0, 0, 1, 1], [], []>} : vector<8x3xbf16>, vector<3x32xbf16>, vector<8x32xf32> -> vector<8x32xf32>
    %7 = vector.broadcast %1 : vector<1x32xf32> to vector<8x32xf32>
    %8 = arith.addf %6, %7 : vector<8x32xf32>
    %cst_10 = arith.constant 0.000000e+00 : f32
    %9 = vector.broadcast %cst_10 : f32 to vector<8x32xf32>
    %10 = arith.maximumf %8, %9 : vector<8x32xf32>
    %c3 = arith.constant 3 : index
    %c0_11 = arith.constant 0 : index
    %c0_12 = arith.constant 0 : index
    %11 = vector.load %arg1[%c3, %c0_11, %c0_12] : memref<6x8x3xbf16, #tpu.memory_space<vmem>>, vector<1x8x3xbf16>
    %12 = vector.shape_cast %11 : vector<1x8x3xbf16> to vector<8x3xbf16>
    %cst_13 = arith.constant dense<0.000000e+00> : vector<8x32xf32>
    %13 = tpu.matmul %12, %0, %cst_13 {dimension_numbers = #tpu.dot_dimension_numbers<[1], [0], [0], [1], [0, 0, 1, 1], [], []>} : vector<8x3xbf16>, vector<3x32xbf16>, vector<8x32xf32> -> vector<8x32xf32>
    %14 = vector.broadcast %1 : vector<1x32xf32> to vector<8x32xf32>
    %15 = arith.addf %13, %14 : vector<8x32xf32>
    %cst_14 = arith.constant 0.000000e+00 : f32
    %16 = vector.broadcast %cst_14 : f32 to vector<8x32xf32>
    %17 = arith.maximumf %15, %16 : vector<8x32xf32>
    %18 = arith.addf %10, %17 : vector<8x32xf32>
    %cst_15 = arith.constant 5.000000e-01 : f32
    %19 = vector.broadcast %cst_15 : f32 to vector<8x32xf32>
    %20 = arith.mulf %18, %19 : vector<8x32xf32>
    %21 = arith.truncf %20 : vector<8x32xf32> to vector<8x32xbf16>
    %cst_16 = arith.constant dense<0.000000e+00> : vector<8x96xf32>
    %22 = tpu.matmul %21, %2, %cst_16 {dimension_numbers = #tpu.dot_dimension_numbers<[1], [0], [0], [1], [0, 0, 1, 1], [], []>} : vector<8x32xbf16>, vector<32x96xbf16>, vector<8x96xf32> -> vector<8x96xf32>
    %23 = vector.broadcast %3 : vector<1x96xf32> to vector<8x96xf32>
    %24 = arith.addf %22, %23 : vector<8x96xf32>
    %25 = vector.extract_strided_slice %24 {offsets = [0, 0], sizes = [8, 32], strides = [1, 1]} : vector<8x96xf32> to vector<8x32xf32>
    %26 = arith.truncf %25 : vector<8x32xf32> to vector<8x32xbf16>
    %c0_17 = arith.constant 0 : index
    %c0_18 = arith.constant 0 : index
    %c0_19 = arith.constant 0 : index
    %c0_20 = arith.constant 0 : index
    %27 = vector.load %arg9[%c0_17, %c0_18, %c0_19, %c0_20] : memref<3x3x8x32xbf16, #tpu.memory_space<vmem>>, vector<1x1x8x32xbf16>
    %28 = vector.shape_cast %27 : vector<1x1x8x32xbf16> to vector<8x32xbf16>
    %29 = vector.shape_cast %26 : vector<8x32xbf16> to vector<1x1x8x32xbf16>
    tpu.vector_store %arg9[%c0_17, %c0_18, %c0_19, %c0_20], %29 {strides = array<i32>} : memref<3x3x8x32xbf16, #tpu.memory_space<vmem>>, vector<1x1x8x32xbf16>,
    %30 = vector.extract_strided_slice %24 {offsets = [0, 32], sizes = [8, 32], strides = [1, 1]} : vector<8x96xf32> to vector<8x32xf32>
    %31 = arith.truncf %30 : vector<8x32xf32> to vector<8x32xbf16>
    %c0_21 = arith.constant 0 : index
    %c1 = arith.constant 1 : index
    %c0_22 = arith.constant 0 : index
    %c0_23 = arith.constant 0 : index
    %32 = vector.load %arg9[%c0_21, %c1, %c0_22, %c0_23] : memref<3x3x8x32xbf16, #tpu.memory_space<vmem>>, vector<1x1x8x32xbf16>
    %33 = vector.shape_cast %32 : vector<1x1x8x32xbf16> to vector<8x32xbf16>
    %34 = vector.shape_cast %31 : vector<8x32xbf16> to vector<1x1x8x32xbf16>
    tpu.vector_store %arg9[%c0_21, %c1, %c0_22, %c0_23], %34 {strides = array<i32>} : memref<3x3x8x32xbf16, #tpu.memory_space<vmem>>, vector<1x1x8x32xbf16>,
    %35 = vector.extract_strided_slice %24 {offsets = [0, 64], sizes = [8, 32], strides = [1, 1]} : vector<8x96xf32> to vector<8x32xf32>
    %36 = arith.truncf %35 : vector<8x32xf32> to vector<8x32xbf16>
    %c0_24 = arith.constant 0 : index
    %c2 = arith.constant 2 : index
    %c0_25 = arith.constant 0 : index
    %c0_26 = arith.constant 0 : index
    %37 = vector.load %arg9[%c0_24, %c2, %c0_25, %c0_26] : memref<3x3x8x32xbf16, #tpu.memory_space<vmem>>, vector<1x1x8x32xbf16>
    %38 = vector.shape_cast %37 : vector<1x1x8x32xbf16> to vector<8x32xbf16>
    %39 = vector.shape_cast %36 : vector<8x32xbf16> to vector<1x1x8x32xbf16>
    tpu.vector_store %arg9[%c0_24, %c2, %c0_25, %c0_26], %39 {strides = array<i32>} : memref<3x3x8x32xbf16, #tpu.memory_space<vmem>>, vector<1x1x8x32xbf16>,
    %c1_27 = arith.constant 1 : index
    %c0_28 = arith.constant 0 : index
    %c0_29 = arith.constant 0 : index
    %40 = vector.load %arg1[%c1_27, %c0_28, %c0_29] : memref<6x8x3xbf16, #tpu.memory_space<vmem>>, vector<1x8x3xbf16>
    %41 = vector.shape_cast %40 : vector<1x8x3xbf16> to vector<8x3xbf16>
    %cst_30 = arith.constant dense<0.000000e+00> : vector<8x32xf32>
    %42 = tpu.matmul %41, %0, %cst_30 {dimension_numbers = #tpu.dot_dimension_numbers<[1], [0], [0], [1], [0, 0, 1, 1], [], []>} : vector<8x3xbf16>, vector<3x32xbf16>, vector<8x32xf32> -> vector<8x32xf32>
    %43 = vector.broadcast %1 : vector<1x32xf32> to vector<8x32xf32>
    %44 = arith.addf %42, %43 : vector<8x32xf32>
    %cst_31 = arith.constant 0.000000e+00 : f32
    %45 = vector.broadcast %cst_31 : f32 to vector<8x32xf32>
    %46 = arith.maximumf %44, %45 : vector<8x32xf32>
    %c4 = arith.constant 4 : index
    %c0_32 = arith.constant 0 : index
    %c0_33 = arith.constant 0 : index
    %47 = vector.load %arg1[%c4, %c0_32, %c0_33] : memref<6x8x3xbf16, #tpu.memory_space<vmem>>, vector<1x8x3xbf16>
    %48 = vector.shape_cast %47 : vector<1x8x3xbf16> to vector<8x3xbf16>
    %cst_34 = arith.constant dense<0.000000e+00> : vector<8x32xf32>
    %49 = tpu.matmul %48, %0, %cst_34 {dimension_numbers = #tpu.dot_dimension_numbers<[1], [0], [0], [1], [0, 0, 1, 1], [], []>} : vector<8x3xbf16>, vector<3x32xbf16>, vector<8x32xf32> -> vector<8x32xf32>
    %50 = vector.broadcast %1 : vector<1x32xf32> to vector<8x32xf32>
    %51 = arith.addf %49, %50 : vector<8x32xf32>
    %cst_35 = arith.constant 0.000000e+00 : f32
    %52 = vector.broadcast %cst_35 : f32 to vector<8x32xf32>
    %53 = arith.maximumf %51, %52 : vector<8x32xf32>
    %54 = arith.addf %46, %53 : vector<8x32xf32>
    %cst_36 = arith.constant 5.000000e-01 : f32
    %55 = vector.broadcast %cst_36 : f32 to vector<8x32xf32>
    %56 = arith.mulf %54, %55 : vector<8x32xf32>
    %57 = arith.truncf %56 : vector<8x32xf32> to vector<8x32xbf16>
    %cst_37 = arith.constant dense<0.000000e+00> : vector<8x96xf32>
    %58 = tpu.matmul %57, %2, %cst_37 {dimension_numbers = #tpu.dot_dimension_numbers<[1], [0], [0], [1], [0, 0, 1, 1], [], []>} : vector<8x32xbf16>, vector<32x96xbf16>, vector<8x96xf32> -> vector<8x96xf32>
    %59 = vector.broadcast %3 : vector<1x96xf32> to vector<8x96xf32>
    %60 = arith.addf %58, %59 : vector<8x96xf32>
    %61 = vector.extract_strided_slice %60 {offsets = [0, 0], sizes = [8, 32], strides = [1, 1]} : vector<8x96xf32> to vector<8x32xf32>
    %62 = arith.truncf %61 : vector<8x32xf32> to vector<8x32xbf16>
    %c1_38 = arith.constant 1 : index
    %c0_39 = arith.constant 0 : index
    %c0_40 = arith.constant 0 : index
    %c0_41 = arith.constant 0 : index
    %63 = vector.load %arg9[%c1_38, %c0_39, %c0_40, %c0_41] : memref<3x3x8x32xbf16, #tpu.memory_space<vmem>>, vector<1x1x8x32xbf16>
    %64 = vector.shape_cast %63 : vector<1x1x8x32xbf16> to vector<8x32xbf16>
    %65 = vector.shape_cast %62 : vector<8x32xbf16> to vector<1x1x8x32xbf16>
    tpu.vector_store %arg9[%c1_38, %c0_39, %c0_40, %c0_41], %65 {strides = array<i32>} : memref<3x3x8x32xbf16, #tpu.memory_space<vmem>>, vector<1x1x8x32xbf16>,
    %66 = vector.extract_strided_slice %60 {offsets = [0, 32], sizes = [8, 32], strides = [1, 1]} : vector<8x96xf32> to vector<8x32xf32>
    %67 = arith.truncf %66 : vector<8x32xf32> to vector<8x32xbf16>
    %c1_42 = arith.constant 1 : index
    %c1_43 = arith.constant 1 : index
    %c0_44 = arith.constant 0 : index
    %c0_45 = arith.constant 0 : index
    %68 = vector.load %arg9[%c1_42, %c1_43, %c0_44, %c0_45] : memref<3x3x8x32xbf16, #tpu.memory_space<vmem>>, vector<1x1x8x32xbf16>
    %69 = vector.shape_cast %68 : vector<1x1x8x32xbf16> to vector<8x32xbf16>
    %70 = vector.shape_cast %67 : vector<8x32xbf16> to vector<1x1x8x32xbf16>
    tpu.vector_store %arg9[%c1_42, %c1_43, %c0_44, %c0_45], %70 {strides = array<i32>} : memref<3x3x8x32xbf16, #tpu.memory_space<vmem>>, vector<1x1x8x32xbf16>,
    %71 = vector.extract_strided_slice %60 {offsets = [0, 64], sizes = [8, 32], strides = [1, 1]} : vector<8x96xf32> to vector<8x32xf32>
    %72 = arith.truncf %71 : vector<8x32xf32> to vector<8x32xbf16>
    %c1_46 = arith.constant 1 : index
    %c2_47 = arith.constant 2 : index
    %c0_48 = arith.constant 0 : index
    %c0_49 = arith.constant 0 : index
    %73 = vector.load %arg9[%c1_46, %c2_47, %c0_48, %c0_49] : memref<3x3x8x32xbf16, #tpu.memory_space<vmem>>, vector<1x1x8x32xbf16>
    %74 = vector.shape_cast %73 : vector<1x1x8x32xbf16> to vector<8x32xbf16>
    %75 = vector.shape_cast %72 : vector<8x32xbf16> to vector<1x1x8x32xbf16>
    tpu.vector_store %arg9[%c1_46, %c2_47, %c0_48, %c0_49], %75 {strides = array<i32>} : memref<3x3x8x32xbf16, #tpu.memory_space<vmem>>, vector<1x1x8x32xbf16>,
    %c2_50 = arith.constant 2 : index
    %c0_51 = arith.constant 0 : index
    %c0_52 = arith.constant 0 : index
    %76 = vector.load %arg1[%c2_50, %c0_51, %c0_52] : memref<6x8x3xbf16, #tpu.memory_space<vmem>>, vector<1x8x3xbf16>
    %77 = vector.shape_cast %76 : vector<1x8x3xbf16> to vector<8x3xbf16>
    %cst_53 = arith.constant dense<0.000000e+00> : vector<8x32xf32>
    %78 = tpu.matmul %77, %0, %cst_53 {dimension_numbers = #tpu.dot_dimension_numbers<[1], [0], [0], [1], [0, 0, 1, 1], [], []>} : vector<8x3xbf16>, vector<3x32xbf16>, vector<8x32xf32> -> vector<8x32xf32>
    %79 = vector.broadcast %1 : vector<1x32xf32> to vector<8x32xf32>
    %80 = arith.addf %78, %79 : vector<8x32xf32>
    %cst_54 = arith.constant 0.000000e+00 : f32
    %81 = vector.broadcast %cst_54 : f32 to vector<8x32xf32>
    %82 = arith.maximumf %80, %81 : vector<8x32xf32>
    %c5 = arith.constant 5 : index
    %c0_55 = arith.constant 0 : index
    %c0_56 = arith.constant 0 : index
    %83 = vector.load %arg1[%c5, %c0_55, %c0_56] : memref<6x8x3xbf16, #tpu.memory_space<vmem>>, vector<1x8x3xbf16>
    %84 = vector.shape_cast %83 : vector<1x8x3xbf16> to vector<8x3xbf16>
    %cst_57 = arith.constant dense<0.000000e+00> : vector<8x32xf32>
    %85 = tpu.matmul %84, %0, %cst_57 {dimension_numbers = #tpu.dot_dimension_numbers<[1], [0], [0], [1], [0, 0, 1, 1], [], []>} : vector<8x3xbf16>, vector<3x32xbf16>, vector<8x32xf32> -> vector<8x32xf32>
    %86 = vector.broadcast %1 : vector<1x32xf32> to vector<8x32xf32>
    %87 = arith.addf %85, %86 : vector<8x32xf32>
    %cst_58 = arith.constant 0.000000e+00 : f32
    %88 = vector.broadcast %cst_58 : f32 to vector<8x32xf32>
    %89 = arith.maximumf %87, %88 : vector<8x32xf32>
    %90 = arith.addf %82, %89 : vector<8x32xf32>
    %cst_59 = arith.constant 5.000000e-01 : f32
    %91 = vector.broadcast %cst_59 : f32 to vector<8x32xf32>
    %92 = arith.mulf %90, %91 : vector<8x32xf32>
    %93 = arith.truncf %92 : vector<8x32xf32> to vector<8x32xbf16>
    %cst_60 = arith.constant dense<0.000000e+00> : vector<8x96xf32>
    %94 = tpu.matmul %93, %2, %cst_60 {dimension_numbers = #tpu.dot_dimension_numbers<[1], [0], [0], [1], [0, 0, 1, 1], [], []>} : vector<8x32xbf16>, vector<32x96xbf16>, vector<8x96xf32> -> vector<8x96xf32>
    %95 = vector.broadcast %3 : vector<1x96xf32> to vector<8x96xf32>
    %96 = arith.addf %94, %95 : vector<8x96xf32>
    %97 = vector.extract_strided_slice %96 {offsets = [0, 0], sizes = [8, 32], strides = [1, 1]} : vector<8x96xf32> to vector<8x32xf32>
    %98 = arith.truncf %97 : vector<8x32xf32> to vector<8x32xbf16>
    %c2_61 = arith.constant 2 : index
    %c0_62 = arith.constant 0 : index
    %c0_63 = arith.constant 0 : index
    %c0_64 = arith.constant 0 : index
    %99 = vector.load %arg9[%c2_61, %c0_62, %c0_63, %c0_64] : memref<3x3x8x32xbf16, #tpu.memory_space<vmem>>, vector<1x1x8x32xbf16>
    %100 = vector.shape_cast %99 : vector<1x1x8x32xbf16> to vector<8x32xbf16>
    %101 = vector.shape_cast %98 : vector<8x32xbf16> to vector<1x1x8x32xbf16>
    tpu.vector_store %arg9[%c2_61, %c0_62, %c0_63, %c0_64], %101 {strides = array<i32>} : memref<3x3x8x32xbf16, #tpu.memory_space<vmem>>, vector<1x1x8x32xbf16>,
    %102 = vector.extract_strided_slice %96 {offsets = [0, 32], sizes = [8, 32], strides = [1, 1]} : vector<8x96xf32> to vector<8x32xf32>
    %103 = arith.truncf %102 : vector<8x32xf32> to vector<8x32xbf16>
    %c2_65 = arith.constant 2 : index
    %c1_66 = arith.constant 1 : index
    %c0_67 = arith.constant 0 : index
    %c0_68 = arith.constant 0 : index
    %104 = vector.load %arg9[%c2_65, %c1_66, %c0_67, %c0_68] : memref<3x3x8x32xbf16, #tpu.memory_space<vmem>>, vector<1x1x8x32xbf16>
    %105 = vector.shape_cast %104 : vector<1x1x8x32xbf16> to vector<8x32xbf16>
    %106 = vector.shape_cast %103 : vector<8x32xbf16> to vector<1x1x8x32xbf16>
    tpu.vector_store %arg9[%c2_65, %c1_66, %c0_67, %c0_68], %106 {strides = array<i32>} : memref<3x3x8x32xbf16, #tpu.memory_space<vmem>>, vector<1x1x8x32xbf16>,
    %107 = vector.extract_strided_slice %96 {offsets = [0, 64], sizes = [8, 32], strides = [1, 1]} : vector<8x96xf32> to vector<8x32xf32>
    %108 = arith.truncf %107 : vector<8x32xf32> to vector<8x32xbf16>
    %c2_69 = arith.constant 2 : index
    %c2_70 = arith.constant 2 : index
    %c0_71 = arith.constant 0 : index
    %c0_72 = arith.constant 0 : index
    %109 = vector.load %arg9[%c2_69, %c2_70, %c0_71, %c0_72] : memref<3x3x8x32xbf16, #tpu.memory_space<vmem>>, vector<1x1x8x32xbf16>
    %110 = vector.shape_cast %109 : vector<1x1x8x32xbf16> to vector<8x32xbf16>
    %111 = vector.shape_cast %108 : vector<8x32xbf16> to vector<1x1x8x32xbf16>
    tpu.vector_store %arg9[%c2_69, %c2_70, %c0_71, %c0_72], %111 {strides = array<i32>} : memref<3x3x8x32xbf16, #tpu.memory_space<vmem>>, vector<1x1x8x32xbf16>,
    %c0_73 = arith.constant 0 : index
    %c0_74 = arith.constant 0 : index
    %112 = vector.load %arg5[%c0_73, %c0_74] : memref<32x64xbf16, #tpu.memory_space<vmem>>, vector<32x64xbf16>
    %c0_75 = arith.constant 0 : index
    %c0_76 = arith.constant 0 : index
    %113 = vector.load %arg6[%c0_75, %c0_76] : memref<32x32xbf16, #tpu.memory_space<vmem>>, vector<32x32xbf16>
    %cst_77 = arith.constant 0.000000e+00 : f32
    %114 = vector.broadcast %cst_77 : f32 to vector<8x32xf32>
    %c0_i32 = arith.constant 0 : i32
    %115 = arith.index_cast %c0_i32 : i32 to index
    %c0_78 = arith.constant 0 : index
    %c0_79 = arith.constant 0 : index
    %c0_80 = arith.constant 0 : index
    %116 = vector.load %arg9[%115, %c0_78, %c0_79, %c0_80] : memref<3x3x8x32xbf16, #tpu.memory_space<vmem>>, vector<1x3x8x32xbf16>
    %117 = vector.shape_cast %116 : vector<1x3x8x32xbf16> to vector<3x8x32xbf16>
    %118 = arith.truncf %114 : vector<8x32xf32> to vector<8x32xbf16>
    %cst_81 = arith.constant dense<0.000000e+00> : vector<8x64xf32>
    %119 = tpu.matmul %118, %112, %cst_81 {dimension_numbers = #tpu.dot_dimension_numbers<[1], [0], [0], [1], [0, 0, 1, 1], [], []>} : vector<8x32xbf16>, vector<32x64xbf16>, vector<8x64xf32> -> vector<8x64xf32>
    %120 = vector.extract_strided_slice %117 {offsets = [0, 0, 0], sizes = [1, 8, 32], strides = [1, 1, 1]} : vector<3x8x32xbf16> to vector<1x8x32xbf16>
    %121 = vector.shape_cast %120 : vector<1x8x32xbf16> to vector<8x32xbf16>
    %122 = arith.extf %121 : vector<8x32xbf16> to vector<8x32xf32>
    %123 = vector.extract_strided_slice %119 {offsets = [0, 0], sizes = [8, 32], strides = [1, 1]} : vector<8x64xf32> to vector<8x32xf32>
    %124 = arith.addf %122, %123 : vector<8x32xf32>
    %125 = arith.negf %124 : vector<8x32xf32>
    %126 = math.exp %125 : vector<8x32xf32>
    %cst_82 = arith.constant 1.000000e+00 : f32
    %127 = vector.broadcast %cst_82 : f32 to vector<8x32xf32>
    %128 = arith.addf %127, %126 : vector<8x32xf32>
    %129 = arith.divf %127, %128 : vector<8x32xf32>
    %130 = vector.extract_strided_slice %117 {offsets = [1, 0, 0], sizes = [1, 8, 32], strides = [1, 1, 1]} : vector<3x8x32xbf16> to vector<1x8x32xbf16>
    %131 = vector.shape_cast %130 : vector<1x8x32xbf16> to vector<8x32xbf16>
    %132 = arith.extf %131 : vector<8x32xbf16> to vector<8x32xf32>
    %133 = vector.extract_strided_slice %119 {offsets = [0, 32], sizes = [8, 32], strides = [1, 1]} : vector<8x64xf32> to vector<8x32xf32>
    %134 = arith.addf %132, %133 : vector<8x32xf32>
    %135 = arith.negf %134 : vector<8x32xf32>
    %136 = math.exp %135 : vector<8x32xf32>
    %cst_83 = arith.constant 1.000000e+00 : f32
    %137 = vector.broadcast %cst_83 : f32 to vector<8x32xf32>
    %138 = arith.addf %137, %136 : vector<8x32xf32>
    %139 = arith.divf %137, %138 : vector<8x32xf32>
    %140 = arith.mulf %139, %114 : vector<8x32xf32>
    %141 = vector.extract_strided_slice %117 {offsets = [2, 0, 0], sizes = [1, 8, 32], strides = [1, 1, 1]} : vector<3x8x32xbf16> to vector<1x8x32xbf16>
    %142 = vector.shape_cast %141 : vector<1x8x32xbf16> to vector<8x32xbf16>
    %143 = arith.extf %142 : vector<8x32xbf16> to vector<8x32xf32>
    %144 = arith.truncf %140 : vector<8x32xf32> to vector<8x32xbf16>
    %cst_84 = arith.constant dense<0.000000e+00> : vector<8x32xf32>
    %145 = tpu.matmul %144, %113, %cst_84 {dimension_numbers = #tpu.dot_dimension_numbers<[1], [0], [0], [1], [0, 0, 1, 1], [], []>} : vector<8x32xbf16>, vector<32x32xbf16>, vector<8x32xf32> -> vector<8x32xf32>
    %146 = arith.addf %143, %145 : vector<8x32xf32>
    %147 = math.tanh %146 : vector<8x32xf32>
    %148 = arith.subf %147, %114 : vector<8x32xf32>
    %149 = arith.mulf %129, %148 : vector<8x32xf32>
    %150 = arith.addf %114, %149 : vector<8x32xf32>
    %c1_i32 = arith.constant 1 : i32
    %151 = arith.index_cast %c1_i32 : i32 to index
    %c0_85 = arith.constant 0 : index
    %c0_86 = arith.constant 0 : index
    %c0_87 = arith.constant 0 : index
    %152 = vector.load %arg9[%151, %c0_85, %c0_86, %c0_87] : memref<3x3x8x32xbf16, #tpu.memory_space<vmem>>, vector<1x3x8x32xbf16>
    %153 = vector.shape_cast %152 : vector<1x3x8x32xbf16> to vector<3x8x32xbf16>
    %154 = arith.truncf %150 : vector<8x32xf32> to vector<8x32xbf16>
    %cst_88 = arith.constant dense<0.000000e+00> : vector<8x64xf32>
    %155 = tpu.matmul %154, %112, %cst_88 {dimension_numbers = #tpu.dot_dimension_numbers<[1], [0], [0], [1], [0, 0, 1, 1], [], []>} : vector<8x32xbf16>, vector<32x64xbf16>, vector<8x64xf32> -> vector<8x64xf32>
    %156 = vector.extract_strided_slice %153 {offsets = [0, 0, 0], sizes = [1, 8, 32], strides = [1, 1, 1]} : vector<3x8x32xbf16> to vector<1x8x32xbf16>
    %157 = vector.shape_cast %156 : vector<1x8x32xbf16> to vector<8x32xbf16>
    %158 = arith.extf %157 : vector<8x32xbf16> to vector<8x32xf32>
    %159 = vector.extract_strided_slice %155 {offsets = [0, 0], sizes = [8, 32], strides = [1, 1]} : vector<8x64xf32> to vector<8x32xf32>
    %160 = arith.addf %158, %159 : vector<8x32xf32>
    %161 = arith.negf %160 : vector<8x32xf32>
    %162 = math.exp %161 : vector<8x32xf32>
    %cst_89 = arith.constant 1.000000e+00 : f32
    %163 = vector.broadcast %cst_89 : f32 to vector<8x32xf32>
    %164 = arith.addf %163, %162 : vector<8x32xf32>
    %165 = arith.divf %163, %164 : vector<8x32xf32>
    %166 = vector.extract_strided_slice %153 {offsets = [1, 0, 0], sizes = [1, 8, 32], strides = [1, 1, 1]} : vector<3x8x32xbf16> to vector<1x8x32xbf16>
    %167 = vector.shape_cast %166 : vector<1x8x32xbf16> to vector<8x32xbf16>
    %168 = arith.extf %167 : vector<8x32xbf16> to vector<8x32xf32>
    %169 = vector.extract_strided_slice %155 {offsets = [0, 32], sizes = [8, 32], strides = [1, 1]} : vector<8x64xf32> to vector<8x32xf32>
    %170 = arith.addf %168, %169 : vector<8x32xf32>
    %171 = arith.negf %170 : vector<8x32xf32>
    %172 = math.exp %171 : vector<8x32xf32>
    %cst_90 = arith.constant 1.000000e+00 : f32
    %173 = vector.broadcast %cst_90 : f32 to vector<8x32xf32>
    %174 = arith.addf %173, %172 : vector<8x32xf32>
    %175 = arith.divf %173, %174 : vector<8x32xf32>
    %176 = arith.mulf %175, %150 : vector<8x32xf32>
    %177 = vector.extract_strided_slice %153 {offsets = [2, 0, 0], sizes = [1, 8, 32], strides = [1, 1, 1]} : vector<3x8x32xbf16> to vector<1x8x32xbf16>
    %178 = vector.shape_cast %177 : vector<1x8x32xbf16> to vector<8x32xbf16>
    %179 = arith.extf %178 : vector<8x32xbf16> to vector<8x32xf32>
    %180 = arith.truncf %176 : vector<8x32xf32> to vector<8x32xbf16>
    %cst_91 = arith.constant dense<0.000000e+00> : vector<8x32xf32>
    %181 = tpu.matmul %180, %113, %cst_91 {dimension_numbers = #tpu.dot_dimension_numbers<[1], [0], [0], [1], [0, 0, 1, 1], [], []>} : vector<8x32xbf16>, vector<32x32xbf16>, vector<8x32xf32> -> vector<8x32xf32>
    %182 = arith.addf %179, %181 : vector<8x32xf32>
    %183 = math.tanh %182 : vector<8x32xf32>
    %184 = arith.subf %183, %150 : vector<8x32xf32>
    %185 = arith.mulf %165, %184 : vector<8x32xf32>
    %186 = arith.addf %150, %185 : vector<8x32xf32>
    %c2_i32 = arith.constant 2 : i32
    %187 = arith.index_cast %c2_i32 : i32 to index
    %c0_92 = arith.constant 0 : index
    %c0_93 = arith.constant 0 : index
    %c0_94 = arith.constant 0 : index
    %188 = vector.load %arg9[%187, %c0_92, %c0_93, %c0_94] : memref<3x3x8x32xbf16, #tpu.memory_space<vmem>>, vector<1x3x8x32xbf16>
    %189 = vector.shape_cast %188 : vector<1x3x8x32xbf16> to vector<3x8x32xbf16>
    %190 = arith.truncf %186 : vector<8x32xf32> to vector<8x32xbf16>
    %cst_95 = arith.constant dense<0.000000e+00> : vector<8x64xf32>
    %191 = tpu.matmul %190, %112, %cst_95 {dimension_numbers = #tpu.dot_dimension_numbers<[1], [0], [0], [1], [0, 0, 1, 1], [], []>} : vector<8x32xbf16>, vector<32x64xbf16>, vector<8x64xf32> -> vector<8x64xf32>
    %192 = vector.extract_strided_slice %189 {offsets = [0, 0, 0], sizes = [1, 8, 32], strides = [1, 1, 1]} : vector<3x8x32xbf16> to vector<1x8x32xbf16>
    %193 = vector.shape_cast %192 : vector<1x8x32xbf16> to vector<8x32xbf16>
    %194 = arith.extf %193 : vector<8x32xbf16> to vector<8x32xf32>
    %195 = vector.extract_strided_slice %191 {offsets = [0, 0], sizes = [8, 32], strides = [1, 1]} : vector<8x64xf32> to vector<8x32xf32>
    %196 = arith.addf %194, %195 : vector<8x32xf32>
    %197 = arith.negf %196 : vector<8x32xf32>
    %198 = math.exp %197 : vector<8x32xf32>
    %cst_96 = arith.constant 1.000000e+00 : f32
    %199 = vector.broadcast %cst_96 : f32 to vector<8x32xf32>
    %200 = arith.addf %199, %198 : vector<8x32xf32>
    %201 = arith.divf %199, %200 : vector<8x32xf32>
    %202 = vector.extract_strided_slice %189 {offsets = [1, 0, 0], sizes = [1, 8, 32], strides = [1, 1, 1]} : vector<3x8x32xbf16> to vector<1x8x32xbf16>
    %203 = vector.shape_cast %202 : vector<1x8x32xbf16> to vector<8x32xbf16>
    %204 = arith.extf %203 : vector<8x32xbf16> to vector<8x32xf32>
    %205 = vector.extract_strided_slice %191 {offsets = [0, 32], sizes = [8, 32], strides = [1, 1]} : vector<8x64xf32> to vector<8x32xf32>
    %206 = arith.addf %204, %205 : vector<8x32xf32>
    %207 = arith.negf %206 : vector<8x32xf32>
    %208 = math.exp %207 : vector<8x32xf32>
    %cst_97 = arith.constant 1.000000e+00 : f32
    %209 = vector.broadcast %cst_97 : f32 to vector<8x32xf32>
    %210 = arith.addf %209, %208 : vector<8x32xf32>
    %211 = arith.divf %209, %210 : vector<8x32xf32>
    %212 = arith.mulf %211, %186 : vector<8x32xf32>
    %213 = vector.extract_strided_slice %189 {offsets = [2, 0, 0], sizes = [1, 8, 32], strides = [1, 1, 1]} : vector<3x8x32xbf16> to vector<1x8x32xbf16>
    %214 = vector.shape_cast %213 : vector<1x8x32xbf16> to vector<8x32xbf16>
    %215 = arith.extf %214 : vector<8x32xbf16> to vector<8x32xf32>
    %216 = arith.truncf %212 : vector<8x32xf32> to vector<8x32xbf16>
    %cst_98 = arith.constant dense<0.000000e+00> : vector<8x32xf32>
    %217 = tpu.matmul %216, %113, %cst_98 {dimension_numbers = #tpu.dot_dimension_numbers<[1], [0], [0], [1], [0, 0, 1, 1], [], []>} : vector<8x32xbf16>, vector<32x32xbf16>, vector<8x32xf32> -> vector<8x32xf32>
    %218 = arith.addf %215, %217 : vector<8x32xf32>
    %219 = math.tanh %218 : vector<8x32xf32>
    %220 = arith.subf %219, %186 : vector<8x32xf32>
    %221 = arith.mulf %201, %220 : vector<8x32xf32>
    %222 = arith.addf %186, %221 : vector<8x32xf32>
    %c3_i32 = arith.constant 3 : i32
    %c0_99 = arith.constant 0 : index
    %c0_100 = arith.constant 0 : index
    %223 = vector.load %arg8[%c0_99, %c0_100] : memref<8x32xf32, #tpu.memory_space<vmem>>, vector<8x32xf32>
    tpu.vector_store %arg8[%c0_99, %c0_100], %222 {strides = array<i32>} : memref<8x32xf32, #tpu.memory_space<vmem>>, vector<8x32xf32>,
    return
  }
  func.func @transform_0(%arg0: i32) -> (i32, i32, i32) {
    %c0_i32 = arith.constant 0 : i32
    %c0_i32_0 = arith.constant 0 : i32
    %c0_i32_1 = arith.constant 0 : i32
    return %c0_i32, %arg0, %c0_i32_0 : i32, i32, i32
  }
  func.func @transform_1(%arg0: i32) -> (i32, i32) {
    %c0_i32 = arith.constant 0 : i32
    %c0_i32_0 = arith.constant 0 : i32
    %c0_i32_1 = arith.constant 0 : i32
    return %c0_i32, %c0_i32_0 : i32, i32
  }
  func.func @transform_2(%arg0: i32) -> (i32, i32) {
    %c0_i32 = arith.constant 0 : i32
    %c0_i32_0 = arith.constant 0 : i32
    %c0_i32_1 = arith.constant 0 : i32
    return %c0_i32, %c0_i32_0 : i32, i32
  }
  func.func @transform_3(%arg0: i32) -> (i32, i32) {
    %c0_i32 = arith.constant 0 : i32
    %c0_i32_0 = arith.constant 0 : i32
    %c0_i32_1 = arith.constant 0 : i32
    return %c0_i32, %c0_i32_0 : i32, i32
  }
  func.func @transform_4(%arg0: i32) -> (i32, i32) {
    %c0_i32 = arith.constant 0 : i32
    %c0_i32_0 = arith.constant 0 : i32
    %c0_i32_1 = arith.constant 0 : i32
    return %c0_i32, %c0_i32_0 : i32, i32
  }
  func.func @transform_5(%arg0: i32) -> (i32, i32) {
    %c0_i32 = arith.constant 0 : i32
    %c0_i32_0 = arith.constant 0 : i32
    %c0_i32_1 = arith.constant 0 : i32
    return %c0_i32, %c0_i32_0 : i32, i32
  }
  func.func @transform_6(%arg0: i32) -> (i32, i32) {
    %c0_i32 = arith.constant 0 : i32
    %c0_i32_0 = arith.constant 0 : i32
    %c0_i32_1 = arith.constant 0 : i32
    return %c0_i32, %c0_i32_0 : i32, i32
  }
  func.func @transform_7(%arg0: i32) -> (i32, i32) {
    %c0_i32 = arith.constant 0 : i32
    %c0_i32_0 = arith.constant 0 : i32
    return %arg0, %c0_i32 : i32, i32
  }
}

</mosaic_0001>

<llo_original>
// kernel: dpc_forward.1
$region0: #{dpc_forward.1}
  #allocation0 [shape = 'u32[]', space=smem, size = 0x4, offset = 0x4, fixed_abs, tag = 'smem constant byte address 0x4 - core index']
  #allocation1 [shape = 'u32[144,128]{1,0:T(1,128)}', space=vmem, size = 0x12000, scoped, tag = 'internal scratch']
  #allocation2 [shape = 'bf16[3,3,8,32]{3,2,1,0:T(8,128)(2,1)}', space=vmem, size = 0x4800, scoped, tag = 'scratch operand']
  %s0 = inlined_call_operand.vmem [shape: bf16[6,8,3], index: 0, kind: input, shape index: {}]
  %s1 = inlined_call_operand.vmem [shape: bf16[3,32], index: 1, kind: input, shape index: {}]
  %s2 = inlined_call_operand.vmem [shape: f32[1,32], index: 2, kind: input, shape index: {}]
  %s3 = inlined_call_operand.vmem [shape: bf16[32,96], index: 3, kind: input, shape index: {}]
  %s4 = inlined_call_operand.vmem [shape: bf16[32,64], index: 4, kind: input, shape index: {}]
  %s5 = inlined_call_operand.vmem [shape: bf16[32,32], index: 5, kind: input, shape index: {}]
  %s6 = inlined_call_operand.vmem [shape: f32[1,96], index: 6, kind: input, shape index: {}]
  %s7 = inlined_call_operand.hbm [shape: f32[8,32], index: 7, kind: output, shape index: {}]
  %s8 = sld [smem:[#allocation0]]
  $region38: #{dpc_forward.1} parent=0
    _
  %s10 = ssub.s32 1, %s8
  %s11 = scalar_select 0, %s10, %s8
  $region1: #{dpc_forward.1} parent=0
    #allocation3 [shape = 'u8[4096]{0}', space=vmem, size = 0x1000, scoped, tag = 'output window, operand 0, single buffered']
    #allocation4 [shape = 's32[1]{0}', space=sflag, size = 0x4, scoped, tag = 'scoped memory for dpc_forward.1']
    %12 = vsyncpa [#allocation4], 0
    // Predicated region
    $region2: #{dpc_forward.1} parent=1 // pred_check
      _
    $region3: #{dpc_forward.1} parent=1 // pred_check_branch
      %14 = sbr.rel (0) target = $region5
    $region4: #{dpc_forward.1} parent=1 // pred_region
      _
    $region5: #{dpc_forward.1} parent=1 // pred_fallthru
      _
    // Predicated region
    $region6: #{dpc_forward.1} parent=1 // pred_check
      _
    $region7: #{dpc_forward.1} parent=1 // pred_check_branch
      %16 = sbr.rel (0) target = $region9
    $region8: #{dpc_forward.1} parent=1 // pred_region
      _
    $region9: #{dpc_forward.1} parent=1 // pred_fallthru
      _
    // Predicated region
    $region10: #{dpc_forward.1} parent=1 // pred_check
      _
    $region11: #{dpc_forward.1} parent=1 // pred_check_branch
      %18 = sbr.rel (0) target = $region13
    $region12: #{dpc_forward.1} parent=1 // pred_region
      _
    $region13: #{dpc_forward.1} parent=1 // pred_fallthru
      _
    // Predicated region
    $region14: #{dpc_forward.1} parent=1 // pred_check
      _
    $region15: #{dpc_forward.1} parent=1 // pred_check_branch
      %20 = sbr.rel (0) target = $region17
    $region16: #{dpc_forward.1} parent=1 // pred_region
      _
    $region17: #{dpc_forward.1} parent=1 // pred_fallthru
      _
    // Predicated region
    $region18: #{dpc_forward.1} parent=1 // pred_check
      _
    $region19: #{dpc_forward.1} parent=1 // pred_check_branch
      %22 = sbr.rel (0) target = $region21
    $region20: #{dpc_forward.1} parent=1 // pred_region
      _
    $region21: #{dpc_forward.1} parent=1 // pred_fallthru
      _
    // Predicated region
    $region22: #{dpc_forward.1} parent=1 // pred_check
      _
    $region23: #{dpc_forward.1} parent=1 // pred_check_branch
      %24 = sbr.rel (0) target = $region25
    $region24: #{dpc_forward.1} parent=1 // pred_region
      _
    $region25: #{dpc_forward.1} parent=1 // pred_fallthru
      _
    // Predicated region
    $region26: #{dpc_forward.1} parent=1 // pred_check
      _
    $region27: #{dpc_forward.1} parent=1 // pred_check_branch
      %26 = sbr.rel (0) target = $region29
    $region28: #{dpc_forward.1} parent=1 // pred_region
      _
    $region29: #{dpc_forward.1} parent=1 // pred_fallthru
      _
    %v28 = vld [vmem:[%s1] sm:$0x3]
    %v29 = vld [vmem:[%s2] sm:$0x1]
    %v30 = vld [vmem:[%s3] sm:$0xf]
    %v31 = vld [vmem:[%s3 + $0x4] sm:$0xf]
    %v32 = vld [vmem:[%s3 + $0x8] sm:$0xf]
    %v33 = vld [vmem:[%s3 + $0xc] sm:$0xf]
    %v34 = vld [vmem:[%s6] sm:$0x1]
    %v35 = vld [vmem:[%s0] sm:$0xf]
    %v37 = vlaneseq
    %v38 = vshrl.u32 %v37, 7
    %v39 = vsub.s32 0, %v38
    %v40 = vrot.slane %v29, %v39
    %vm42 = vcmask 23552
    %v44 = vsel %vm42, %v35, 0
    %vm46 = vcmask 1040384
    %vm47 = vcmask 1041408
    %v48 = vsel %vm46, 4294967295, 65535
    %v49 = vsel %vm47, %v48, 0
    %v51 = vand.u32 %v28, %v49
    %53 = vmatprep.subr.bf16.mxu0 0
    %54 = vmatpush1.bf16.msra.mxu0 %v51
    %55 = vmatprep.subr.bf16.mxu0 0
    %56 = vmatpush1.bf16.msra.mxu0 0
    %57 = vmatprep.subr.bf16.mxu0 0
    %58 = vmatpush1.bf16.msra.mxu0 0
    %59 = vmatprep.subr.bf16.mxu0 0
    %60 = vmatpush1.bf16.msra.mxu0 0
    %61 = vmatprep.subr.bf16.mxu0 0
    %62 = vmatpush1.bf16.msra.mxu0 0
    %63 = vmatprep.subr.bf16.mxu0 0
    %64 = vmatpush1.bf16.msra.mxu0 0
    %65 = vmatprep.subr.bf16.mxu0 0
    %66 = vmatpush1.bf16.msra.mxu0 0
    %67 = vmatprep.subr.bf16.mxu0 0
    %68 = vmatpush1.bf16.msra.mxu0 0
    %69 = vmatprep.subr.bf16.mxu0 0
    %70 = vmatpush1.bf16.msra.mxu0 0
    %71 = vmatprep.subr.bf16.mxu0 0
    %72 = vmatpush1.bf16.msra.mxu0 0
    %73 = vmatprep.subr.bf16.mxu0 0
    %74 = vmatpush1.bf16.msra.mxu0 0
    %75 = vmatprep.subr.bf16.mxu0 0
    %76 = vmatpush1.bf16.msra.mxu0 0
    %77 = vmatprep.subr.bf16.mxu0 0
    %78 = vmatpush1.bf16.msra.mxu0 0
    %79 = vmatprep.subr.bf16.mxu0 0
    %80 = vmatpush1.bf16.msra.mxu0 0
    %81 = vmatprep.subr.bf16.mxu0 0
    %82 = vmatpush1.bf16.msra.mxu0 0
    %83 = vmatprep.subr.bf16.mxu0 0
    %84 = vmatpush1.bf16.msra.mxu0 0
    %85 = vmatprep.mubr.bf16.mxu0 0
    %86 = vmatmul.mubr.bf16.gmra.mrb[0].mxu0 %v44
    %v87 = vpop.f32.mrb[0].mxu0
    %v88 = vadd.f32 %v40, %v87
    %v89 = vpop.f32.mrb[0].mxu0
    %v90 = vpop.f32.mrb[0].mxu0
    %v91 = vpop.f32.mrb[0].mxu0
    %92 = vdwg.mxu0
    %v93 = vmax.f32 %v88, 0.0
    %s94 = scalar_lea.vmem %s0, 12
    %v95 = vld [vmem:[%s94] sm:$0xf]
    %v97 = vsel %vm42, %v95, 0
    %99 = vmatprep.subr.bf16.mxu0 0
    %100 = vmatpush1.bf16.msra.mxu0 %v51
    %101 = vmatprep.subr.bf16.mxu0 0
    %102 = vmatpush1.bf16.msra.mxu0 0
    %103 = vmatprep.subr.bf16.mxu0 0
    %104 = vmatpush1.bf16.msra.mxu0 0
    %105 = vmatprep.subr.bf16.mxu0 0
    %106 = vmatpush1.bf16.msra.mxu0 0
    %107 = vmatprep.subr.bf16.mxu0 0
    %108 = vmatpush1.bf16.msra.mxu0 0
    %109 = vmatprep.subr.bf16.mxu0 0
    %110 = vmatpush1.bf16.msra.mxu0 0
    %111 = vmatprep.subr.bf16.mxu0 0
    %112 = vmatpush1.bf16.msra.mxu0 0
    %113 = vmatprep.subr.bf16.mxu0 0
    %114 = vmatpush1.bf16.msra.mxu0 0
    %115 = vmatprep.subr.bf16.mxu0 0
    %116 = vmatpush1.bf16.msra.mxu0 0
    %117 = vmatprep.subr.bf16.mxu0 0
    %118 = vmatpush1.bf16.msra.mxu0 0
    %119 = vmatprep.subr.bf16.mxu0 0
    %120 = vmatpush1.bf16.msra.mxu0 0
    %121 = vmatprep.subr.bf16.mxu0 0
    %122 = vmatpush1.bf16.msra.mxu0 0
    %123 = vmatprep.subr.bf16.mxu0 0
    %124 = vmatpush1.bf16.msra.mxu0 0
    %125 = vmatprep.subr.bf16.mxu0 0
    %126 = vmatpush1.bf16.msra.mxu0 0
    %127 = vmatprep.subr.bf16.mxu0 0
    %128 = vmatpush1.bf16.msra.mxu0 0
    %129 = vmatprep.subr.bf16.mxu0 0
    %130 = vmatpush1.bf16.msra.mxu0 0
    %131 = vmatprep.mubr.bf16.mxu0 0
    %132 = vmatmul.mubr.bf16.gmra.mrb[0].mxu0 %v97
    %v133 = vpop.f32.mrb[0].mxu0
    %v134 = vadd.f32 %v40, %v133
    %v135 = vpop.f32.mrb[0].mxu0
    %v136 = vpop.f32.mrb[0].mxu0
    %v137 = vpop.f32.mrb[0].mxu0
    %138 = vdwg.mxu0
    %v139 = vmax.f32 %v134, 0.0
    %v140 = vadd.f32 %v93, %v139
    %v141 = vmul.f32 %v140, 0.5
    %v142 = vpack.c.bf16 %v141, %v141
    %v144 = vlaneseq
    %v145 = vshrl.u32 %v144, 7
    %v146 = vsub.s32 0, %v145
    %v147 = vrot.slane %v34, %v146
    %v153 = vunpack.c.l.b16 %v30
    %v154 = vunpack.c.l.b16 %v31
    %v155 = vunpack.c.l.b16 %v32
    %v156 = vunpack.c.l.b16 %v33
    %v157 = vpack.c.b16 %v154, %v153
    %v158 = vpack.c.b16 %v156, %v155
    %vm161 = vcmask 261120
    %v163 = vsel %vm161, %v142, 0
    %165 = vmatprep.subr.bf16.mxu0 0
    %166 = vmatpush1.bf16.msra.mxu0 %v157
    %167 = vmatprep.subr.bf16.mxu0 0
    %168 = vmatpush1.bf16.msra.mxu0 %v158
    %169 = vmatprep.subr.bf16.mxu0 0
    %170 = vmatpush1.bf16.msra.mxu0 0
    %171 = vmatprep.subr.bf16.mxu0 0
    %172 = vmatpush1.bf16.msra.mxu0 0
    %173 = vmatprep.subr.bf16.mxu0 0
    %174 = vmatpush1.bf16.msra.mxu0 0
    %175 = vmatprep.subr.bf16.mxu0 0
    %176 = vmatpush1.bf16.msra.mxu0 0
    %177 = vmatprep.subr.bf16.mxu0 0
    %178 = vmatpush1.bf16.msra.mxu0 0
    %179 = vmatprep.subr.bf16.mxu0 0
    %180 = vmatpush1.bf16.msra.mxu0 0
    %181 = vmatprep.subr.bf16.mxu0 0
    %182 = vmatpush1.bf16.msra.mxu0 0
    %183 = vmatprep.subr.bf16.mxu0 0
    %184 = vmatpush1.bf16.msra.mxu0 0
    %185 = vmatprep.subr.bf16.mxu0 0
    %186 = vmatpush1.bf16.msra.mxu0 0
    %187 = vmatprep.subr.bf16.mxu0 0
    %188 = vmatpush1.bf16.msra.mxu0 0
    %189 = vmatprep.subr.bf16.mxu0 0
    %190 = vmatpush1.bf16.msra.mxu0 0
    %191 = vmatprep.subr.bf16.mxu0 0
    %192 = vmatpush1.bf16.msra.mxu0 0
    %193 = vmatprep.subr.bf16.mxu0 0
    %194 = vmatpush1.bf16.msra.mxu0 0
    %195 = vmatprep.subr.bf16.mxu0 0
    %196 = vmatpush1.bf16.msra.mxu0 0
    %197 = vmatprep.mubr.bf16.mxu0 0
    %198 = vmatmul.mubr.bf16.gmra.mrb[0].mxu0 %v163
    %v199 = vpop.f32.mrb[0].mxu0
    %v200 = vadd.f32 %v147, %v199
    %v201 = vpop.f32.mrb[0].mxu0
    %v202 = vpop.f32.mrb[0].mxu0
    %v203 = vpop.f32.mrb[0].mxu0
    %204 = vdwg.mxu0
    %v205 = vpack.c.bf16 %v200, %v200
    %vm206 = vcmask 257024
    %207 = vst.msk [vmem:[#allocation2] sm:$0xf] %vm206, %v205
    %v209 = vunpack.c.l.b16 %v205
    %v210 = vpack.c.b16 %v209, %v209
    %211 = vrot.lane.b32.xlu0 %v210, 96
    %v212 = vpop.permute.xlu0 %211
    %s214 = scalar_lea.vmem [#allocation2], 4
    %215 = vst.msk [vmem:[%s214] sm:$0xf] %vm206, %v212
    %216 = vrot.lane.b32.xlu0 %v210, 64
    %v217 = vpop.permute.xlu0 %216
    %s219 = scalar_lea.vmem [#allocation2], 8
    %220 = vst.msk [vmem:[%s219] sm:$0xf] %vm206, %v217
    %s221 = scalar_lea.vmem %s0, 4
    %v222 = vld [vmem:[%s221] sm:$0xf]
    %v224 = vsel %vm42, %v222, 0
    %226 = vmatprep.subr.bf16.mxu0 0
    %227 = vmatpush1.bf16.msra.mxu0 %v51
    %228 = vmatprep.subr.bf16.mxu0 0
    %229 = vmatpush1.bf16.msra.mxu0 0
    %230 = vmatprep.subr.bf16.mxu0 0
    %231 = vmatpush1.bf16.msra.mxu0 0
    %232 = vmatprep.subr.bf16.mxu0 0
    %233 = vmatpush1.bf16.msra.mxu0 0
    %234 = vmatprep.subr.bf16.mxu0 0
    %235 = vmatpush1.bf16.msra.mxu0 0
    %236 = vmatprep.subr.bf16.mxu0 0
    %237 = vmatpush1.bf16.msra.mxu0 0
    %238 = vmatprep.subr.bf16.mxu0 0
    %239 = vmatpush1.bf16.msra.mxu0 0
    %240 = vmatprep.subr.bf16.mxu0 0
    %241 = vmatpush1.bf16.msra.mxu0 0
    %242 = vmatprep.subr.bf16.mxu0 0
    %243 = vmatpush1.bf16.msra.mxu0 0
    %244 = vmatprep.subr.bf16.mxu0 0
    %245 = vmatpush1.bf16.msra.mxu0 0
    %246 = vmatprep.subr.bf16.mxu0 0
    %247 = vmatpush1.bf16.msra.mxu0 0
    %248 = vmatprep.subr.bf16.mxu0 0
    %249 = vmatpush1.bf16.msra.mxu0 0
    %250 = vmatprep.subr.bf16.mxu0 0
    %251 = vmatpush1.bf16.msra.mxu0 0
    %252 = vmatprep.subr.bf16.mxu0 0
    %253 = vmatpush1.bf16.msra.mxu0 0
    %254 = vmatprep.subr.bf16.mxu0 0
    %255 = vmatpush1.bf16.msra.mxu0 0
    %256 = vmatprep.subr.bf16.mxu0 0
    %257 = vmatpush1.bf16.msra.mxu0 0
    %258 = vmatprep.mubr.bf16.mxu0 0
    %259 = vmatmul.mubr.bf16.gmra.mrb[0].mxu0 %v224
    %v260 = vpop.f32.mrb[0].mxu0
    %v261 = vadd.f32 %v40, %v260
    %v262 = vpop.f32.mrb[0].mxu0
    %v263 = vpop.f32.mrb[0].mxu0
    %v264 = vpop.f32.mrb[0].mxu0
    %265 = vdwg.mxu0
    %v266 = vmax.f32 %v261, 0.0
    %s267 = scalar_lea.vmem %s0, 16
    %v268 = vld [vmem:[%s267] sm:$0xf]
    %v270 = vsel %vm42, %v268, 0
    %272 = vmatprep.subr.bf16.mxu0 0
    %273 = vmatpush1.bf16.msra.mxu0 %v51
    %274 = vmatprep.subr.bf16.mxu0 0
    %275 = vmatpush1.bf16.msra.mxu0 0
    %276 = vmatprep.subr.bf16.mxu0 0
    %277 = vmatpush1.bf16.msra.mxu0 0
    %278 = vmatprep.subr.bf16.mxu0 0
    %279 = vmatpush1.bf16.msra.mxu0 0
    %280 = vmatprep.subr.bf16.mxu0 0
    %281 = vmatpush1.bf16.msra.mxu0 0
    %282 = vmatprep.subr.bf16.mxu0 0
    %283 = vmatpush1.bf16.msra.mxu0 0
    %284 = vmatprep.subr.bf16.mxu0 0
    %285 = vmatpush1.bf16.msra.mxu0 0
    %286 = vmatprep.subr.bf16.mxu0 0
    %287 = vmatpush1.bf16.msra.mxu0 0
    %288 = vmatprep.subr.bf16.mxu0 0
    %289 = vmatpush1.bf16.msra.mxu0 0
    %290 = vmatprep.subr.bf16.mxu0 0
    %291 = vmatpush1.bf16.msra.mxu0 0
    %292 = vmatprep.subr.bf16.mxu0 0
    %293 = vmatpush1.bf16.msra.mxu0 0
    %294 = vmatprep.subr.bf16.mxu0 0
    %295 = vmatpush1.bf16.msra.mxu0 0
    %296 = vmatprep.subr.bf16.mxu0 0
    %297 = vmatpush1.bf16.msra.mxu0 0
    %298 = vmatprep.subr.bf16.mxu0 0
    %299 = vmatpush1.bf16.msra.mxu0 0
    %300 = vmatprep.subr.bf16.mxu0 0
    %301 = vmatpush1.bf16.msra.mxu0 0
    %302 = vmatprep.subr.bf16.mxu0 0
    %303 = vmatpush1.bf16.msra.mxu0 0
    %304 = vmatprep.mubr.bf16.mxu0 0
    %305 = vmatmul.mubr.bf16.gmra.mrb[0].mxu0 %v270
    %v306 = vpop.f32.mrb[0].mxu0
    %v307 = vadd.f32 %v40, %v306
    %v308 = vpop.f32.mrb[0].mxu0
    %v309 = vpop.f32.mrb[0].mxu0
    %v310 = vpop.f32.mrb[0].mxu0
    %311 = vdwg.mxu0
    %v312 = vmax.f32 %v307, 0.0
    %v313 = vadd.f32 %v266, %v312
    %v314 = vmul.f32 %v313, 0.5
    %v315 = vpack.c.bf16 %v314, %v314
    %v317 = vsel %vm161, %v315, 0
    %319 = vmatprep.subr.bf16.mxu0 0
    %320 = vmatpush1.bf16.msra.mxu0 %v157
    %321 = vmatprep.subr.bf16.mxu0 0
    %322 = vmatpush1.bf16.msra.mxu0 %v158
    %323 = vmatprep.subr.bf16.mxu0 0
    %324 = vmatpush1.bf16.msra.mxu0 0
    %325 = vmatprep.subr.bf16.mxu0 0
    %326 = vmatpush1.bf16.msra.mxu0 0
    %327 = vmatprep.subr.bf16.mxu0 0
    %328 = vmatpush1.bf16.msra.mxu0 0
    %329 = vmatprep.subr.bf16.mxu0 0
    %330 = vmatpush1.bf16.msra.mxu0 0
    %331 = vmatprep.subr.bf16.mxu0 0
    %332 = vmatpush1.bf16.msra.mxu0 0
    %333 = vmatprep.subr.bf16.mxu0 0
    %334 = vmatpush1.bf16.msra.mxu0 0
    %335 = vmatprep.subr.bf16.mxu0 0
    %336 = vmatpush1.bf16.msra.mxu0 0
    %337 = vmatprep.subr.bf16.mxu0 0
    %338 = vmatpush1.bf16.msra.mxu0 0
    %339 = vmatprep.subr.bf16.mxu0 0
    %340 = vmatpush1.bf16.msra.mxu0 0
    %341 = vmatprep.subr.bf16.mxu0 0
    %342 = vmatpush1.bf16.msra.mxu0 0
    %343 = vmatprep.subr.bf16.mxu0 0
    %344 = vmatpush1.bf16.msra.mxu0 0
    %345 = vmatprep.subr.bf16.mxu0 0
    %346 = vmatpush1.bf16.msra.mxu0 0
    %347 = vmatprep.subr.bf16.mxu0 0
    %348 = vmatpush1.bf16.msra.mxu0 0
    %349 = vmatprep.subr.bf16.mxu0 0
    %350 = vmatpush1.bf16.msra.mxu0 0
    %351 = vmatprep.mubr.bf16.mxu0 0
    %352 = vmatmul.mubr.bf16.gmra.mrb[0].mxu0 %v317
    %v353 = vpop.f32.mrb[0].mxu0
    %v354 = vadd.f32 %v147, %v353
    %v355 = vpop.f32.mrb[0].mxu0
    %v356 = vpop.f32.mrb[0].mxu0
    %v357 = vpop.f32.mrb[0].mxu0
    %358 = vdwg.mxu0
    %v359 = vpack.c.bf16 %v354, %v354
    %s360 = scalar_lea.vmem [#allocation2], 12
    %361 = vst.msk [vmem:[%s360] sm:$0xf] %vm206, %v359
    %v363 = vunpack.c.l.b16 %v359
    %v364 = vpack.c.b16 %v363, %v363
    %365 = vrot.lane.b32.xlu0 %v364, 96
    %v366 = vpop.permute.xlu0 %365
    %s368 = scalar_lea.vmem [#allocation2], 16
    %369 = vst.msk [vmem:[%s368] sm:$0xf] %vm206, %v366
    %370 = vrot.lane.b32.xlu0 %v364, 64
    %v371 = vpop.permute.xlu0 %370
    %s373 = scalar_lea.vmem [#allocation2], 20
    %374 = vst.msk [vmem:[%s373] sm:$0xf] %vm206, %v371
    %s375 = scalar_lea.vmem %s0, 8
    %v376 = vld [vmem:[%s375] sm:$0xf]
    %v378 = vsel %vm42, %v376, 0
    %380 = vmatprep.subr.bf16.mxu0 0
    %381 = vmatpush1.bf16.msra.mxu0 %v51
    %382 = vmatprep.subr.bf16.mxu0 0
    %383 = vmatpush1.bf16.msra.mxu0 0
    %384 = vmatprep.subr.bf16.mxu0 0
    %385 = vmatpush1.bf16.msra.mxu0 0
    %386 = vmatprep.subr.bf16.mxu0 0
    %387 = vmatpush1.bf16.msra.mxu0 0
    %388 = vmatprep.subr.bf16.mxu0 0
    %389 = vmatpush1.bf16.msra.mxu0 0
    %390 = vmatprep.subr.bf16.mxu0 0
    %391 = vmatpush1.bf16.msra.mxu0 0
    %392 = vmatprep.subr.bf16.mxu0 0
    %393 = vmatpush1.bf16.msra.mxu0 0
    %394 = vmatprep.subr.bf16.mxu0 0
    %395 = vmatpush1.bf16.msra.mxu0 0
    %396 = vmatprep.subr.bf16.mxu0 0
    %397 = vmatpush1.bf16.msra.mxu0 0
    %398 = vmatprep.subr.bf16.mxu0 0
    %399 = vmatpush1.bf16.msra.mxu0 0
    %400 = vmatprep.subr.bf16.mxu0 0
    %401 = vmatpush1.bf16.msra.mxu0 0
    %402 = vmatprep.subr.bf16.mxu0 0
    %403 = vmatpush1.bf16.msra.mxu0 0
    %404 = vmatprep.subr.bf16.mxu0 0
    %405 = vmatpush1.bf16.msra.mxu0 0
    %406 = vmatprep.subr.bf16.mxu0 0
    %407 = vmatpush1.bf16.msra.mxu0 0
    %408 = vmatprep.subr.bf16.mxu0 0
    %409 = vmatpush1.bf16.msra.mxu0 0
    %410 = vmatprep.subr.bf16.mxu0 0
    %411 = vmatpush1.bf16.msra.mxu0 0
    %412 = vmatprep.mubr.bf16.mxu0 0
    %413 = vmatmul.mubr.bf16.gmra.mrb[0].mxu0 %v378
    %v414 = vpop.f32.mrb[0].mxu0
    %v415 = vadd.f32 %v40, %v414
    %v416 = vpop.f32.mrb[0].mxu0
    %v417 = vpop.f32.mrb[0].mxu0
    %v418 = vpop.f32.mrb[0].mxu0
    %419 = vdwg.mxu0
    %v420 = vmax.f32 %v415, 0.0
    %s421 = scalar_lea.vmem %s0, 20
    %v422 = vld [vmem:[%s421] sm:$0xf]
    %v424 = vsel %vm42, %v422, 0
    %426 = vmatprep.subr.bf16.mxu0 0
    %427 = vmatpush1.bf16.msra.mxu0 %v51
    %428 = vmatprep.subr.bf16.mxu0 0
    %429 = vmatpush1.bf16.msra.mxu0 0
    %430 = vmatprep.subr.bf16.mxu0 0
    %431 = vmatpush1.bf16.msra.mxu0 0
    %432 = vmatprep.subr.bf16.mxu0 0
    %433 = vmatpush1.bf16.msra.mxu0 0
    %434 = vmatprep.subr.bf16.mxu0 0
    %435 = vmatpush1.bf16.msra.mxu0 0
    %436 = vmatprep.subr.bf16.mxu0 0
    %437 = vmatpush1.bf16.msra.mxu0 0
    %438 = vmatprep.subr.bf16.mxu0 0
    %439 = vmatpush1.bf16.msra.mxu0 0
    %440 = vmatprep.subr.bf16.mxu0 0
    %441 = vmatpush1.bf16.msra.mxu0 0
    %442 = vmatprep.subr.bf16.mxu0 0
    %443 = vmatpush1.bf16.msra.mxu0 0
    %444 = vmatprep.subr.bf16.mxu0 0
    %445 = vmatpush1.bf16.msra.mxu0 0
    %446 = vmatprep.subr.bf16.mxu0 0
    %447 = vmatpush1.bf16.msra.mxu0 0
    %448 = vmatprep.subr.bf16.mxu0 0
    %449 = vmatpush1.bf16.msra.mxu0 0
    %450 = vmatprep.subr.bf16.mxu0 0
    %451 = vmatpush1.bf16.msra.mxu0 0
    %452 = vmatprep.subr.bf16.mxu0 0
    %453 = vmatpush1.bf16.msra.mxu0 0
    %454 = vmatprep.subr.bf16.mxu0 0
    %455 = vmatpush1.bf16.msra.mxu0 0
    %456 = vmatprep.subr.bf16.mxu0 0
    %457 = vmatpush1.bf16.msra.mxu0 0
    %458 = vmatprep.mubr.bf16.mxu0 0
    %459 = vmatmul.mubr.bf16.gmra.mrb[0].mxu0 %v424
    %v460 = vpop.f32.mrb[0].mxu0
    %v461 = vadd.f32 %v40, %v460
    %v462 = vpop.f32.mrb[0].mxu0
    %v463 = vpop.f32.mrb[0].mxu0
    %v464 = vpop.f32.mrb[0].mxu0
    %465 = vdwg.mxu0
    %v466 = vmax.f32 %v461, 0.0
    %v467 = vadd.f32 %v420, %v466
    %v468 = vmul.f32 %v467, 0.5
    %v469 = vpack.c.bf16 %v468, %v468
    %v471 = vsel %vm161, %v469, 0
    %473 = vmatprep.subr.bf16.mxu0 0
    %474 = vmatpush1.bf16.msra.mxu0 %v157
    %475 = vmatprep.subr.bf16.mxu0 0
    %476 = vmatpush1.bf16.msra.mxu0 %v158
    %477 = vmatprep.subr.bf16.mxu0 0
    %478 = vmatpush1.bf16.msra.mxu0 0
    %479 = vmatprep.subr.bf16.mxu0 0
    %480 = vmatpush1.bf16.msra.mxu0 0
    %481 = vmatprep.subr.bf16.mxu0 0
    %482 = vmatpush1.bf16.msra.mxu0 0
    %483 = vmatprep.subr.bf16.mxu0 0
    %484 = vmatpush1.bf16.msra.mxu0 0
    %485 = vmatprep.subr.bf16.mxu0 0
    %486 = vmatpush1.bf16.msra.mxu0 0
    %487 = vmatprep.subr.bf16.mxu0 0
    %488 = vmatpush1.bf16.msra.mxu0 0
    %489 = vmatprep.subr.bf16.mxu0 0
    %490 = vmatpush1.bf16.msra.mxu0 0
    %491 = vmatprep.subr.bf16.mxu0 0
    %492 = vmatpush1.bf16.msra.mxu0 0
    %493 = vmatprep.subr.bf16.mxu0 0
    %494 = vmatpush1.bf16.msra.mxu0 0
    %495 = vmatprep.subr.bf16.mxu0 0
    %496 = vmatpush1.bf16.msra.mxu0 0
    %497 = vmatprep.subr.bf16.mxu0 0
    %498 = vmatpush1.bf16.msra.mxu0 0
    %499 = vmatprep.subr.bf16.mxu0 0
    %500 = vmatpush1.bf16.msra.mxu0 0
    %501 = vmatprep.subr.bf16.mxu0 0
    %502 = vmatpush1.bf16.msra.mxu0 0
    %503 = vmatprep.subr.bf16.mxu0 0
    %504 = vmatpush1.bf16.msra.mxu0 0
    %505 = vmatprep.mubr.bf16.mxu0 0
    %506 = vmatmul.mubr.bf16.gmra.mrb[0].mxu0 %v471
    %v507 = vpop.f32.mrb[0].mxu0
    %v508 = vadd.f32 %v147, %v507
    %v509 = vpop.f32.mrb[0].mxu0
    %v510 = vpop.f32.mrb[0].mxu0
    %v511 = vpop.f32.mrb[0].mxu0
    %512 = vdwg.mxu0
    %v513 = vpack.c.bf16 %v508, %v508
    %s514 = scalar_lea.vmem [#allocation2], 24
    %515 = vst.msk [vmem:[%s514] sm:$0xf] %vm206, %v513
    %v517 = vunpack.c.l.b16 %v513
    %v518 = vpack.c.b16 %v517, %v517
    %519 = vrot.lane.b32.xlu0 %v518, 96
    %v520 = vpop.permute.xlu0 %519
    %s522 = scalar_lea.vmem [#allocation2], 28
    %523 = vst.msk [vmem:[%s522] sm:$0xf] %vm206, %v520
    %524 = vrot.lane.b32.xlu0 %v518, 64
    %v525 = vpop.permute.xlu0 %524
    %s527 = scalar_lea.vmem [#allocation2], 32
    %528 = vst.msk [vmem:[%s527] sm:$0xf] %vm206, %v525
    %v529 = vld [vmem:[%s4] sm:$0xf]
    %v530 = vld [vmem:[%s4 + $0x4] sm:$0xf]
    %v531 = vld [vmem:[%s4 + $0x8] sm:$0xf]
    %v532 = vld [vmem:[%s4 + $0xc] sm:$0xf]
    %v533 = vld [vmem:[%s5] sm:$0xf]
    %v534 = vld [vmem:[%s5 + $0x4] sm:$0xf]
    %v535 = vld [vmem:[%s5 + $0x8] sm:$0xf]
    %v536 = vld [vmem:[%s5 + $0xc] sm:$0xf]
    %v537 = vld [vmem:[#allocation2] sm:$0xf]
    %v538 = vld [vmem:[#allocation2 + $0x4] sm:$0xf]
    %v539 = vld [vmem:[#allocation2 + $0x8] sm:$0xf]
    %v544 = vunpack.c.l.b16 %v529
    %v545 = vunpack.c.l.b16 %v530
    %v546 = vunpack.c.l.b16 %v531
    %v547 = vunpack.c.l.b16 %v532
    %v548 = vpack.c.b16 %v545, %v544
    %v549 = vpack.c.b16 %v547, %v546
    %v553 = vsel %vm161, 0, 0
    %555 = vmatprep.subr.bf16.mxu0 0
    %556 = vmatpush1.bf16.msra.mxu0 %v548
    %557 = vmatprep.subr.bf16.mxu0 0
    %558 = vmatpush1.bf16.msra.mxu0 %v549
    %559 = vmatprep.subr.bf16.mxu0 0
    %560 = vmatpush1.bf16.msra.mxu0 0
    %561 = vmatprep.subr.bf16.mxu0 0
    %562 = vmatpush1.bf16.msra.mxu0 0
    %563 = vmatprep.subr.bf16.mxu0 0
    %564 = vmatpush1.bf16.msra.mxu0 0
    %565 = vmatprep.subr.bf16.mxu0 0
    %566 = vmatpush1.bf16.msra.mxu0 0
    %567 = vmatprep.subr.bf16.mxu0 0
    %568 = vmatpush1.bf16.msra.mxu0 0
    %569 = vmatprep.subr.bf16.mxu0 0
    %570 = vmatpush1.bf16.msra.mxu0 0
    %571 = vmatprep.subr.bf16.mxu0 0
    %572 = vmatpush1.bf16.msra.mxu0 0
    %573 = vmatprep.subr.bf16.mxu0 0
    %574 = vmatpush1.bf16.msra.mxu0 0
    %575 = vmatprep.subr.bf16.mxu0 0
    %576 = vmatpush1.bf16.msra.mxu0 0
    %577 = vmatprep.subr.bf16.mxu0 0
    %578 = vmatpush1.bf16.msra.mxu0 0
    %579 = vmatprep.subr.bf16.mxu0 0
    %580 = vmatpush1.bf16.msra.mxu0 0
    %581 = vmatprep.subr.bf16.mxu0 0
    %582 = vmatpush1.bf16.msra.mxu0 0
    %583 = vmatprep.subr.bf16.mxu0 0
    %584 = vmatpush1.bf16.msra.mxu0 0
    %585 = vmatprep.subr.bf16.mxu0 0
    %586 = vmatpush1.bf16.msra.mxu0 0
    %587 = vmatprep.mubr.bf16.mxu0 0
    %588 = vmatmul.mubr.bf16.gmra.mrb[0].mxu0 %v553
    %v589 = vpop.f32.mrb[0].mxu0
    %v590 = vadd.f32 0.0, %v589
    %v591 = vpop.f32.mrb[0].mxu0
    %v592 = vpop.f32.mrb[0].mxu0
    %v593 = vpop.f32.mrb[0].mxu0
    %594 = vdwg.mxu0
    %v595 = vunpack.c.l.bf16 %v537
    %v596 = vadd.f32 %v595, %v590
    %v597 = vxor.u32 %v596, 2147483648
    %v598 = vmul.f32 %v597, 1.442695
    %v599 = vpow.pop %v598
    %v600 = vadd.f32 %v599, 1.0
    %v601 = vrcp.pop %v600
    %v602 = vmul.f32 1.0, %v601
    %v603 = vunpack.c.l.bf16 %v538
    %605 = vrot.lane.b32.xlu0 %v590, 96
    %v606 = vpop.permute.xlu0 %605
    %v608 = vadd.f32 %v603, %v606
    %v609 = vxor.u32 %v608, 2147483648
    %v610 = vmul.f32 %v609, 1.442695
    %v611 = vpow.pop %v610
    %v612 = vadd.f32 %v611, 1.0
    %v613 = vrcp.pop %v612
    %v614 = vmul.f32 1.0, %v613
    %v615 = vmul.f32 %v614, 0.0
    %v616 = vunpack.c.l.bf16 %v539
    %v617 = vpack.c.bf16 %v615, %v615
    %v622 = vunpack.c.l.b16 %v533
    %v623 = vunpack.c.l.b16 %v534
    %v624 = vunpack.c.l.b16 %v535
    %v625 = vunpack.c.l.b16 %v536
    %v626 = vpack.c.b16 %v623, %v622
    %v627 = vpack.c.b16 %v625, %v624
    %v631 = vsel %vm161, %v617, 0
    %633 = vmatprep.subr.bf16.mxu0 0
    %634 = vmatpush1.bf16.msra.mxu0 %v626
    %635 = vmatprep.subr.bf16.mxu0 0
    %636 = vmatpush1.bf16.msra.mxu0 %v627
    %637 = vmatprep.subr.bf16.mxu0 0
    %638 = vmatpush1.bf16.msra.mxu0 0
    %639 = vmatprep.subr.bf16.mxu0 0
    %640 = vmatpush1.bf16.msra.mxu0 0
    %641 = vmatprep.subr.bf16.mxu0 0
    %642 = vmatpush1.bf16.msra.mxu0 0
    %643 = vmatprep.subr.bf16.mxu0 0
    %644 = vmatpush1.bf16.msra.mxu0 0
    %645 = vmatprep.subr.bf16.mxu0 0
    %646 = vmatpush1.bf16.msra.mxu0 0
    %647 = vmatprep.subr.bf16.mxu0 0
    %648 = vmatpush1.bf16.msra.mxu0 0
    %649 = vmatprep.subr.bf16.mxu0 0
    %650 = vmatpush1.bf16.msra.mxu0 0
    %651 = vmatprep.subr.bf16.mxu0 0
    %652 = vmatpush1.bf16.msra.mxu0 0
    %653 = vmatprep.subr.bf16.mxu0 0
    %654 = vmatpush1.bf16.msra.mxu0 0
    %655 = vmatprep.subr.bf16.mxu0 0
    %656 = vmatpush1.bf16.msra.mxu0 0
    %657 = vmatprep.subr.bf16.mxu0 0
    %658 = vmatpush1.bf16.msra.mxu0 0
    %659 = vmatprep.subr.bf16.mxu0 0
    %660 = vmatpush1.bf16.msra.mxu0 0
    %661 = vmatprep.subr.bf16.mxu0 0
    %662 = vmatpush1.bf16.msra.mxu0 0
    %663 = vmatprep.subr.bf16.mxu0 0
    %664 = vmatpush1.bf16.msra.mxu0 0
    %665 = vmatprep.mubr.bf16.mxu0 0
    %666 = vmatmul.mubr.bf16.gmra.mrb[0].mxu0 %v631
    %v667 = vpop.f32.mrb[0].mxu0
    %v668 = vadd.f32 0.0, %v667
    %v669 = vpop.f32.mrb[0].mxu0
    %v670 = vpop.f32.mrb[0].mxu0
    %v671 = vpop.f32.mrb[0].mxu0
    %672 = vdwg.mxu0
    %v673 = vadd.f32 %v616, %v668
    %v674 = vtanh.pop %v673
    %v675 = vmul.f32 %v602, %v674
    %v676 = vadd.f32 %v675, 0.0
    %v677 = vld [vmem:[%s360] sm:$0xf]
    %v678 = vld [vmem:[%s360 + $0x4] sm:$0xf]
    %v679 = vld [vmem:[%s360 + $0x8] sm:$0xf]
    %v680 = vpack.c.bf16 %v676, %v676
    %v682 = vsel %vm161, %v680, 0
    %684 = vmatprep.subr.bf16.mxu0 0
    %685 = vmatpush1.bf16.msra.mxu0 %v548
    %686 = vmatprep.subr.bf16.mxu0 0
    %687 = vmatpush1.bf16.msra.mxu0 %v549
    %688 = vmatprep.subr.bf16.mxu0 0
    %689 = vmatpush1.bf16.msra.mxu0 0
    %690 = vmatprep.subr.bf16.mxu0 0
    %691 = vmatpush1.bf16.msra.mxu0 0
    %692 = vmatprep.subr.bf16.mxu0 0
    %693 = vmatpush1.bf16.msra.mxu0 0
    %694 = vmatprep.subr.bf16.mxu0 0
    %695 = vmatpush1.bf16.msra.mxu0 0
    %696 = vmatprep.subr.bf16.mxu0 0
    %697 = vmatpush1.bf16.msra.mxu0 0
    %698 = vmatprep.subr.bf16.mxu0 0
    %699 = vmatpush1.bf16.msra.mxu0 0
    %700 = vmatprep.subr.bf16.mxu0 0
    %701 = vmatpush1.bf16.msra.mxu0 0
    %702 = vmatprep.subr.bf16.mxu0 0
    %703 = vmatpush1.bf16.msra.mxu0 0
    %704 = vmatprep.subr.bf16.mxu0 0
    %705 = vmatpush1.bf16.msra.mxu0 0
    %706 = vmatprep.subr.bf16.mxu0 0
    %707 = vmatpush1.bf16.msra.mxu0 0
    %708 = vmatprep.subr.bf16.mxu0 0
    %709 = vmatpush1.bf16.msra.mxu0 0
    %710 = vmatprep.subr.bf16.mxu0 0
    %711 = vmatpush1.bf16.msra.mxu0 0
    %712 = vmatprep.subr.bf16.mxu0 0
    %713 = vmatpush1.bf16.msra.mxu0 0
    %714 = vmatprep.subr.bf16.mxu0 0
    %715 = vmatpush1.bf16.msra.mxu0 0
    %716 = vmatprep.mubr.bf16.mxu0 0
    %717 = vmatmul.mubr.bf16.gmra.mrb[0].mxu0 %v682
    %v718 = vpop.f32.mrb[0].mxu0
    %v719 = vadd.f32 0.0, %v718
    %v720 = vpop.f32.mrb[0].mxu0
    %v721 = vpop.f32.mrb[0].mxu0
    %v722 = vpop.f32.mrb[0].mxu0
    %723 = vdwg.mxu0
    %v724 = vunpack.c.l.bf16 %v677
    %v725 = vadd.f32 %v724, %v719
    %v726 = vxor.u32 %v725, 2147483648
    %v727 = vmul.f32 %v726, 1.442695
    %v728 = vpow.pop %v727
    %v729 = vadd.f32 %v728, 1.0
    %v730 = vrcp.pop %v729
    %v731 = vmul.f32 1.0, %v730
    %v732 = vunpack.c.l.bf16 %v678
    %734 = vrot.lane.b32.xlu0 %v719, 96
    %v735 = vpop.permute.xlu0 %734
    %v737 = vadd.f32 %v732, %v735
    %v738 = vxor.u32 %v737, 2147483648
    %v739 = vmul.f32 %v738, 1.442695
    %v740 = vpow.pop %v739
    %v741 = vadd.f32 %v740, 1.0
    %v742 = vrcp.pop %v741
    %v743 = vmul.f32 1.0, %v742
    %v744 = vmul.f32 %v743, %v676
    %v745 = vunpack.c.l.bf16 %v679
    %v746 = vpack.c.bf16 %v744, %v744
    %v748 = vsel %vm161, %v746, 0
    %750 = vmatprep.subr.bf16.mxu0 0
    %751 = vmatpush1.bf16.msra.mxu0 %v626
    %752 = vmatprep.subr.bf16.mxu0 0
    %753 = vmatpush1.bf16.msra.mxu0 %v627
    %754 = vmatprep.subr.bf16.mxu0 0
    %755 = vmatpush1.bf16.msra.mxu0 0
    %756 = vmatprep.subr.bf16.mxu0 0
    %757 = vmatpush1.bf16.msra.mxu0 0
    %758 = vmatprep.subr.bf16.mxu0 0
    %759 = vmatpush1.bf16.msra.mxu0 0
    %760 = vmatprep.subr.bf16.mxu0 0
    %761 = vmatpush1.bf16.msra.mxu0 0
    %762 = vmatprep.subr.bf16.mxu0 0
    %763 = vmatpush1.bf16.msra.mxu0 0
    %764 = vmatprep.subr.bf16.mxu0 0
    %765 = vmatpush1.bf16.msra.mxu0 0
    %766 = vmatprep.subr.bf16.mxu0 0
    %767 = vmatpush1.bf16.msra.mxu0 0
    %768 = vmatprep.subr.bf16.mxu0 0
    %769 = vmatpush1.bf16.msra.mxu0 0
    %770 = vmatprep.subr.bf16.mxu0 0
    %771 = vmatpush1.bf16.msra.mxu0 0
    %772 = vmatprep.subr.bf16.mxu0 0
    %773 = vmatpush1.bf16.msra.mxu0 0
    %774 = vmatprep.subr.bf16.mxu0 0
    %775 = vmatpush1.bf16.msra.mxu0 0
    %776 = vmatprep.subr.bf16.mxu0 0
    %777 = vmatpush1.bf16.msra.mxu0 0
    %778 = vmatprep.subr.bf16.mxu0 0
    %779 = vmatpush1.bf16.msra.mxu0 0
    %780 = vmatprep.subr.bf16.mxu0 0
    %781 = vmatpush1.bf16.msra.mxu0 0
    %782 = vmatprep.mubr.bf16.mxu0 0
    %783 = vmatmul.mubr.bf16.gmra.mrb[0].mxu0 %v748
    %v784 = vpop.f32.mrb[0].mxu0
    %v785 = vadd.f32 0.0, %v784
    %v786 = vpop.f32.mrb[0].mxu0
    %v787 = vpop.f32.mrb[0].mxu0
    %v788 = vpop.f32.mrb[0].mxu0
    %789 = vdwg.mxu0
    %v790 = vadd.f32 %v745, %v785
    %v791 = vtanh.pop %v790
    %v792 = vsub.f32 %v791, %v676
    %v793 = vmul.f32 %v731, %v792
    %v794 = vadd.f32 %v676, %v793
    %v795 = vld [vmem:[%s514] sm:$0xf]
    %v796 = vld [vmem:[%s514 + $0x4] sm:$0xf]
    %v797 = vld [vmem:[%s514 + $0x8] sm:$0xf]
    %v798 = vpack.c.bf16 %v794, %v794
    %v800 = vsel %vm161, %v798, 0
    %802 = vmatprep.subr.bf16.mxu0 0
    %803 = vmatpush1.bf16.msra.mxu0 %v548
    %804 = vmatprep.subr.bf16.mxu0 0
    %805 = vmatpush1.bf16.msra.mxu0 %v549
    %806 = vmatprep.subr.bf16.mxu0 0
    %807 = vmatpush1.bf16.msra.mxu0 0
    %808 = vmatprep.subr.bf16.mxu0 0
    %809 = vmatpush1.bf16.msra.mxu0 0
    %810 = vmatprep.subr.bf16.mxu0 0
    %811 = vmatpush1.bf16.msra.mxu0 0
    %812 = vmatprep.subr.bf16.mxu0 0
    %813 = vmatpush1.bf16.msra.mxu0 0
    %814 = vmatprep.subr.bf16.mxu0 0
    %815 = vmatpush1.bf16.msra.mxu0 0
    %816 = vmatprep.subr.bf16.mxu0 0
    %817 = vmatpush1.bf16.msra.mxu0 0
    %818 = vmatprep.subr.bf16.mxu0 0
    %819 = vmatpush1.bf16.msra.mxu0 0
    %820 = vmatprep.subr.bf16.mxu0 0
    %821 = vmatpush1.bf16.msra.mxu0 0
    %822 = vmatprep.subr.bf16.mxu0 0
    %823 = vmatpush1.bf16.msra.mxu0 0
    %824 = vmatprep.subr.bf16.mxu0 0
    %825 = vmatpush1.bf16.msra.mxu0 0
    %826 = vmatprep.subr.bf16.mxu0 0
    %827 = vmatpush1.bf16.msra.mxu0 0
    %828 = vmatprep.subr.bf16.mxu0 0
    %829 = vmatpush1.bf16.msra.mxu0 0
    %830 = vmatprep.subr.bf16.mxu0 0
    %831 = vmatpush1.bf16.msra.mxu0 0
    %832 = vmatprep.subr.bf16.mxu0 0
    %833 = vmatpush1.bf16.msra.mxu0 0
    %834 = vmatprep.mubr.bf16.mxu0 0
    %835 = vmatmul.mubr.bf16.gmra.mrb[0].mxu0 %v800
    %v836 = vpop.f32.mrb[0].mxu0
    %v837 = vadd.f32 0.0, %v836
    %v838 = vpop.f32.mrb[0].mxu0
    %v839 = vpop.f32.mrb[0].mxu0
    %v840 = vpop.f32.mrb[0].mxu0
    %841 = vdwg.mxu0
    %v842 = vunpack.c.l.bf16 %v795
    %v843 = vadd.f32 %v842, %v837
    %v844 = vxor.u32 %v843, 2147483648
    %v845 = vmul.f32 %v844, 1.442695
    %v846 = vpow.pop %v845
    %v847 = vadd.f32 %v846, 1.0
    %v848 = vrcp.pop %v847
    %v849 = vmul.f32 1.0, %v848
    %v850 = vunpack.c.l.bf16 %v796
    %852 = vrot.lane.b32.xlu0 %v837, 96
    %v853 = vpop.permute.xlu0 %852
    %v855 = vadd.f32 %v850, %v853
    %v856 = vxor.u32 %v855, 2147483648
    %v857 = vmul.f32 %v856, 1.442695
    %v858 = vpow.pop %v857
    %v859 = vadd.f32 %v858, 1.0
    %v860 = vrcp.pop %v859
    %v861 = vmul.f32 1.0, %v860
    %v862 = vmul.f32 %v861, %v794
    %v863 = vunpack.c.l.bf16 %v797
    %v864 = vpack.c.bf16 %v862, %v862
    %v866 = vsel %vm161, %v864, 0
    %868 = vmatprep.subr.bf16.mxu0 0
    %869 = vmatpush1.bf16.msra.mxu0 %v626
    %870 = vmatprep.subr.bf16.mxu0 0
    %871 = vmatpush1.bf16.msra.mxu0 %v627
    %872 = vmatprep.subr.bf16.mxu0 0
    %873 = vmatpush1.bf16.msra.mxu0 0
    %874 = vmatprep.subr.bf16.mxu0 0
    %875 = vmatpush1.bf16.msra.mxu0 0
    %876 = vmatprep.subr.bf16.mxu0 0
    %877 = vmatpush1.bf16.msra.mxu0 0
    %878 = vmatprep.subr.bf16.mxu0 0
    %879 = vmatpush1.bf16.msra.mxu0 0
    %880 = vmatprep.subr.bf16.mxu0 0
    %881 = vmatpush1.bf16.msra.mxu0 0
    %882 = vmatprep.subr.bf16.mxu0 0
    %883 = vmatpush1.bf16.msra.mxu0 0
    %884 = vmatprep.subr.bf16.mxu0 0
    %885 = vmatpush1.bf16.msra.mxu0 0
    %886 = vmatprep.subr.bf16.mxu0 0
    %887 = vmatpush1.bf16.msra.mxu0 0
    %888 = vmatprep.subr.bf16.mxu0 0
    %889 = vmatpush1.bf16.msra.mxu0 0
    %890 = vmatprep.subr.bf16.mxu0 0
    %891 = vmatpush1.bf16.msra.mxu0 0
    %892 = vmatprep.subr.bf16.mxu0 0
    %893 = vmatpush1.bf16.msra.mxu0 0
    %894 = vmatprep.subr.bf16.mxu0 0
    %895 = vmatpush1.bf16.msra.mxu0 0
    %896 = vmatprep.subr.bf16.mxu0 0
    %897 = vmatpush1.bf16.msra.mxu0 0
    %898 = vmatprep.subr.bf16.mxu0 0
    %899 = vmatpush1.bf16.msra.mxu0 0
    %900 = vmatprep.mubr.bf16.mxu0 0
    %901 = vmatmul.mubr.bf16.gmra.mrb[0].mxu0 %v866
    %v902 = vpop.f32.mrb[0].mxu0
    %v903 = vadd.f32 0.0, %v902
    %v904 = vpop.f32.mrb[0].mxu0
    %v905 = vpop.f32.mrb[0].mxu0
    %v906 = vpop.f32.mrb[0].mxu0
    %907 = vdwg.mxu0
    %v908 = vadd.f32 %v863, %v903
    %v909 = vtanh.pop %v908
    %v910 = vsub.f32 %v909, %v794
    %v911 = vmul.f32 %v849, %v910
    %v912 = vadd.f32 %v794, %v911
    %913 = vst.msk [vmem:[#allocation3] sm:$0xff] %vm161, %v912
    // Predicated region
    $region30: #{dpc_forward.1} parent=1 // pred_check
      _
    $region31: #{dpc_forward.1} parent=1 // pred_check_branch
      %915 = sbr.rel (0) target = $region33
    $region32: #{dpc_forward.1} parent=1 // pred_region
      %s917 = ssub.s32 128, 128
      %918 = vsyncadd [#allocation4], %s917
      %s920 = sshll.u32 [#allocation3], 4
      %s921 = int_to_ptr.vmem [resolvable:$true] %s920
      %923 = dma.vmem_to_hbm [thread:$0]  %s921, 128, %s7, [#allocation4]
    $region33: #{dpc_forward.1} parent=1 // pred_fallthru
      _
    // Predicated region
    $region34: #{dpc_forward.1} parent=1 // pred_check
      _
    $region35: #{dpc_forward.1} parent=1 // pred_check_branch
      %925 = sbr.rel (0) target = $region37
    $region36: #{dpc_forward.1} parent=1 // pred_region
      %926 = dma.done [#allocation4], 128
    $region37: #{dpc_forward.1} parent=1 // pred_fallthru
      _
    %927 = vsyncpa [#allocation4], 1

</llo_original>
